<compile_context>
chip_gen: v5e
topology: v5e:2x2
jax: 0.10.0
libtpu: 0.0.40
codegen_flags: <defaults>
</compile_context>

<pallas_src>
import functools

import jax
import jax.numpy as jnp
from jax.experimental import pallas as pl
from jax.experimental.pallas import tpu as pltpu

_SCALE_CLAMP = 4.135166556742356  # log(1000 / 16), detectron2 Box2BoxTransform default


# ----------------------------------------------------------------------------
# Fused kernel: normalize -> backbone 3x3 -> RPN 3x3 -> fused 1x1 heads -> decode
# ----------------------------------------------------------------------------
def _fused_kernel(x_ref, mean_ref, mask_ref, w_bb_ref, b_bb_ref,
                  w_rpn_ref, b_rpn_ref, w_head_ref, b_head_ref, anchors_ref,
                  out_ref, *,
                  W, A, L, head_rows,
                  img_h, img_w, scale_x, scale_y, out_h, out_w):
    # Static tap offsets of a 3x3 SAME conv on (Cin, L) lane-dense activations
    # (L = Bc*H*W, lane index n = b*H*W + h*W + w).
    offsets = tuple((kh - 1) * W + (kw - 1) for kh in range(3) for kw in range(3))
    masks = mask_ref[...]                                     # (9, L) border validity

    def conv3x3(src, w_ref, b_ref):
        # Lane-dense im2col: 9 lane rolls (XLU) + border-mask multiplies (VPU),
        # concatenated into an 8-row-aligned (9*Cin, L) operand, one MXU dot.
        taps = []
        for t, off in enumerate(offsets):
            sh = src if off == 0 else pltpu.roll(src, shift=(-off) % L, axis=1)
            taps.append(sh * masks[t:t + 1, :])
        patches = jnp.concatenate(taps, axis=0).astype(jnp.bfloat16)
        y = jnp.dot(w_ref[...], patches,
                    preferred_element_type=jnp.float32) + b_ref[...]
        return jnp.maximum(y, 0.0)

    # Pixel normalization: subtract the mean here (1/std is folded into the backbone
    # weights); zero-masked border taps then reproduce zero-padding of the
    # normalized image exactly.
    x_c = x_ref[...] - mean_ref[...]                          # (C_pad, L) f32
    feat = conv3x3(x_c, w_bb_ref, b_bb_ref)                   # (Cbb, L) f32
    rpn_feat = conv3x3(feat, w_rpn_ref, b_rpn_ref)            # (Cbb, L) f32

    # Fused 1x1 heads: rows = [obj(A), dx(A), dy(A), dw(A), dh(A), pad].
    head = jnp.dot(w_head_ref[...], rpn_feat.astype(jnp.bfloat16),
                   preferred_element_type=jnp.float32) + b_head_ref[...]  # (head_rows, L)

    obj = head[0:A]
    dx = head[A:2 * A]
    dy = head[2 * A:3 * A]
    dw = head[3 * A:4 * A]
    dh = head[4 * A:5 * A]

    acx = anchors_ref[0]
    acy = anchors_ref[1]
    aw = anchors_ref[2]
    ah = anchors_ref[3]

    # Box2BoxTransform.apply_deltas (weights = (1,1,1,1)).
    dw = jnp.minimum(dw, _SCALE_CLAMP)
    dh = jnp.minimum(dh, _SCALE_CLAMP)
    pcx = dx * aw + acx
    pcy = dy * ah + acy
    pw = jnp.exp(dw) * aw
    ph = jnp.exp(dh) * ah
    x1 = pcx - 0.5 * pw
    y1 = pcy - 0.5 * ph
    x2 = pcx + 0.5 * pw
    y2 = pcy + 0.5 * ph

    # Boxes.clip(image_size), then detector_postprocess rescale + clip again.
    x1 = jnp.clip(jnp.clip(x1, 0.0, img_w) * scale_x, 0.0, out_w)
    x2 = jnp.clip(jnp.clip(x2, 0.0, img_w) * scale_x, 0.0, out_w)
    y1 = jnp.clip(jnp.clip(y1, 0.0, img_h) * scale_y, 0.0, out_h)
    y2 = jnp.clip(jnp.clip(y2, 0.0, img_h) * scale_y, 0.0, out_h)

    parts = [obj, x1, y1, x2, y2]
    if head_rows > 5 * A:
        parts.append(jnp.zeros((head_rows - 5 * A, L), jnp.float32))
    out_ref[...] = jnp.concatenate(parts, axis=0)             # single lane-dense store


# ----------------------------------------------------------------------------
# Trace-time parameter preparation (std fold, im2col weights, head fuse, padding)
# ----------------------------------------------------------------------------
def _prep_params(params, C, C_pad, Cbb, A, head_rows):
    mean = params["pixel_mean"].reshape(C).astype(jnp.float32)
    inv_std = params["pixel_inv_std"].reshape(C).astype(jnp.float32)

    # Fold 1/std into the backbone conv weights (exact); zero-pad Cin -> C_pad so
    # every im2col tap is an 8-row sublane-aligned block.
    w_bb = params["w_bb"] * inv_std[None, None, :, None]                    # (3,3,C,Cbb)
    w_bb = jnp.pad(w_bb, ((0, 0), (0, 0), (0, C_pad - C), (0, 0)))          # (3,3,C_pad,Cbb)
    w_bb_mat = jnp.transpose(w_bb, (3, 0, 1, 2)).reshape(Cbb, 9 * C_pad).astype(jnp.bfloat16)
    b_bb_col = params["b_bb"].reshape(Cbb, 1).astype(jnp.float32)

    w_rpn_mat = jnp.transpose(params["w_rpn"], (3, 0, 1, 2)).reshape(
        Cbb, 9 * Cbb).astype(jnp.bfloat16)
    b_rpn_col = params["b_rpn"].reshape(Cbb, 1).astype(jnp.float32)

    # Fuse objectness + anchor-delta 1x1 heads; delta rows component-major, padded
    # to a sublane multiple (zero rows contribute nothing).
    pad_rows = head_rows - 5 * A
    w_obj_t = params["w_obj"].T                                             # (A, Cbb)
    w_del_t = jnp.transpose(params["w_del"].reshape(Cbb, A, 4),
                            (2, 1, 0)).reshape(4 * A, Cbb)                  # (4A, Cbb)
    w_head = jnp.concatenate(
        [w_obj_t, w_del_t, jnp.zeros((pad_rows, Cbb), jnp.float32)], 0).astype(jnp.bfloat16)
    b_obj = params["b_obj"].reshape(A)
    b_del = jnp.transpose(params["b_del"].reshape(A, 4), (1, 0)).reshape(4 * A)
    b_head = jnp.concatenate(
        [b_obj, b_del, jnp.zeros((pad_rows,), jnp.float32)]).reshape(head_rows, 1).astype(jnp.float32)

    mean_col = jnp.pad(mean.reshape(C, 1), ((0, C_pad - C), (0, 0)))
    return mean_col, w_bb_mat, b_bb_col, w_rpn_mat, b_rpn_col, w_head, b_head


def make_tap_masks(H, W, Bc):
    # Validity mask per 3x3 tap (same (kh, kw) order as the im2col weights),
    # lane-dense (9, Bc*H*W).  Zero where the neighbour falls outside the image.
    HW = H * W
    hw = jnp.arange(HW)
    hh = hw // W
    ww = hw % W
    rows = []
    for dh in (-1, 0, 1):
        for dw in (-1, 0, 1):
            valid = ((hh + dh >= 0) & (hh + dh < H) &
                     (ww + dw >= 0) & (ww + dw < W)).astype(jnp.float32)
            rows.append(jnp.tile(valid, Bc))
    return jnp.stack(rows, axis=0)                                          # (9, Bc*HW)


def make_anchors_cxcywh(H, W, stride, sizes, Bc):
    # Anchors in (cx, cy, w, h) form, lane-dense (4, A, Bc*H*W); centers at i*stride
    # (detectron2 DefaultAnchorGenerator offset = 0.0).
    A = len(sizes)
    HW = H * W
    xs = jnp.arange(W, dtype=jnp.float32) * stride
    ys = jnp.arange(H, dtype=jnp.float32) * stride
    yy, xx = jnp.meshgrid(ys, xs, indexing="ij")
    cx = jnp.broadcast_to(xx.reshape(1, HW), (A, HW))
    cy = jnp.broadcast_to(yy.reshape(1, HW), (A, HW))
    sz = jnp.asarray(sizes, jnp.float32).reshape(A, 1)
    aw = jnp.broadcast_to(sz, (A, HW))
    anc = jnp.stack([cx, cy, aw, aw], axis=0)                               # (4, A, HW)
    # TODO(synk): only square anchors (aspect ratio 1.0); real RPN uses sizes x ratios.
    return jnp.tile(anc, (1, 1, Bc))                                        # (4, A, Bc*HW)


# ----------------------------------------------------------------------------
# Forward
# ----------------------------------------------------------------------------
def proposal_network_forward(images_nchw, params, *, num_anchors, out_hw, topk,
                             anchor_sizes=(8.0, 16.0, 32.0), grid_steps=1):
    B, C, H, W = images_nchw.shape
    A = num_anchors
    Cbb = params["w_bb"].shape[-1]
    HW = H * W
    N = A * HW
    out_h, out_w = out_hw

    # Batch-in-lanes: grid_steps=1 packs the whole batch into the lane dim (one
    # grid step, best for v5e/v6e's single TensorCore).  On v7x use grid_steps=2
    # to shard two lane-chunks across its two TensorCores.
    assert B % grid_steps == 0, "grid_steps must divide the batch"
    Bc = B // grid_steps
    L = Bc * HW

    C_pad = ((C + 7) // 8) * 8            # sublane-align input channels
    head_rows = ((5 * A + 7) // 8) * 8    # sublane-align fused head rows

    (mean_col, w_bb_mat, b_bb_col, w_rpn_mat, b_rpn_col,
     w_head, b_head) = _prep_params(params, C, C_pad, Cbb, A, head_rows)

    # Channel-major, lane-dense image layout: (C_pad, B*HW), lanes = b*HW + h*W + w.
    x = jnp.transpose(images_nchw, (1, 0, 2, 3)).reshape(C, B * HW)
    x = jnp.pad(x, ((0, C_pad - C), (0, 0))).astype(jnp.float32)

    masks = make_tap_masks(H, W, Bc)                                        # (9, L)
    # TODO(synk): stride=1 matches the synthetic single-level backbone; a real FPN
    # level would use the backbone's actual stride here.
    anchors = make_anchors_cxcywh(H, W, 1, anchor_sizes, Bc)                # (4, A, L)

    kern = functools.partial(
        _fused_kernel, W=W, A=A, L=L, head_rows=head_rows,
        img_h=float(H), img_w=float(W),
        scale_x=float(out_w) / float(W), scale_y=float(out_h) / float(H),
        out_h=float(out_h), out_w=float(out_w))

    flops = 2 * B * HW * (Cbb * 9 * C_pad + Cbb * 9 * Cbb + head_rows * Cbb)
    bytes_accessed = (4 * (C_pad * B * HW + C_pad + 9 * L + 4 * A * L
                           + 2 * Cbb + head_rows + head_rows * B * HW)
                      + 2 * (Cbb * 9 * C_pad + Cbb * 9 * Cbb + head_rows * Cbb))

    out = pl.pallas_call(
        kern,
        out_shape=jax.ShapeDtypeStruct((head_rows, B * HW), jnp.float32),
        grid=(grid_steps,),
        in_specs=[
            pl.BlockSpec((C_pad, L), lambda g: (0, g)),           # image chunk
            pl.BlockSpec((C_pad, 1), lambda g: (0, 0)),           # pixel mean
            pl.BlockSpec((9, L), lambda g: (0, 0)),               # 3x3 border masks
            pl.BlockSpec((Cbb, 9 * C_pad), lambda g: (0, 0)),     # backbone im2col W (bf16)
            pl.BlockSpec((Cbb, 1), lambda g: (0, 0)),
            pl.BlockSpec((Cbb, 9 * Cbb), lambda g: (0, 0)),       # RPN im2col W (bf16)
            pl.BlockSpec((Cbb, 1), lambda g: (0, 0)),
            pl.BlockSpec((head_rows, Cbb), lambda g: (0, 0)),     # fused heads W (bf16)
            pl.BlockSpec((head_rows, 1), lambda g: (0, 0)),
            pl.BlockSpec((4, A, L), lambda g: (0, 0, 0)),         # anchors (cx,cy,w,h)
        ],
        out_specs=pl.BlockSpec((head_rows, L), lambda g: (0, g)),
        compiler_params=pltpu.CompilerParams(
            dimension_semantics=("parallel",),
            vmem_limit_bytes=32 * 1024 * 1024),
        cost_estimate=pl.CostEstimate(flops=flops,
                                      transcendentals=2 * A * B * HW,
                                      bytes_accessed=bytes_accessed),
    )(x, mean_col, masks, w_bb_mat, b_bb_col, w_rpn_mat, b_rpn_col,
      w_head, b_head, anchors)

    # Split the fused lane-dense output slab outside the kernel (cheap XLA ops).
    out_r = out.reshape(head_rows, B, HW)

    def _plane(k):  # rows k*A .. (k+1)*A -> per-image flattened N = A*HW (n = a*HW + hw)
        return jnp.transpose(out_r[k * A:(k + 1) * A], (1, 0, 2)).reshape(B, N)

    obj_flat = _plane(0)                                                    # (B, N)
    boxes = jnp.stack([_plane(1), _plane(2), _plane(3), _plane(4)], axis=-1)  # (B, N, 4)

    logits, idx = jax.lax.top_k(obj_flat, topk)
    prop = jnp.take_along_axis(boxes, idx[:, :, None], axis=1)              # (B, topk, 4)
    # TODO(synk): batched NMS inside find_top_rpn_proposals has no clean Pallas equivalent.
    # TODO(synk): ImageList.from_tensors size_divisibility padding skipped (H, W already divisible).

    return [{"proposals": {"proposal_boxes": prop[i],
                           "objectness_logits": logits[i]}} for i in range(B)]


# ----------------------------------------------------------------------------
if __name__ == "__main__":
    key = jax.random.PRNGKey(0)
    keys = jax.random.split(key, 6)

    B, C, H, W = 2, 3, 16, 16
    Cbb, A = 8, 3

    images = jax.random.uniform(keys[0], (B, C, H, W), jnp.float32) * 255.0  # NCHW like PyTorch

    params = {
        "pixel_mean": jnp.array([[103.53, 116.28, 123.675]], jnp.float32),          # (1, C)
        "pixel_inv_std": 1.0 / jnp.array([[57.375, 57.12, 58.395]], jnp.float32),   # (1, C)
        "w_bb": jax.random.normal(keys[1], (3, 3, C, Cbb), jnp.float32) * 0.1,
        "b_bb": jnp.zeros((1, Cbb), jnp.float32),
        "w_rpn": jax.random.normal(keys[2], (3, 3, Cbb, Cbb), jnp.float32) * 0.1,
        "b_rpn": jnp.zeros((1, Cbb), jnp.float32),
        "w_obj": jax.random.normal(keys[3], (Cbb, A), jnp.float32) * 0.1,
        "b_obj": jnp.zeros((1, A), jnp.float32),
        "w_del": jax.random.normal(keys[4], (Cbb, 4 * A), jnp.float32) * 0.1,
        "b_del": jnp.zeros((1, 4 * A), jnp.float32),
    }

    results = proposal_network_forward(images, params,
                                       num_anchors=A, out_hw=(2 * H, 2 * W), topk=64)
    jax.block_until_ready([r["proposals"]["proposal_boxes"] for r in results])
    print("KERNEL_OK")
</pallas_src>

<mosaic_0001>
module attributes {stable_mosaic.version = 11 : i64} {
  func.func @_fused_kernel(%arg0: i32, %arg1: memref<8x512xf32, #tpu.memory_space<vmem>>, %arg2: memref<8x1xf32, #tpu.memory_space<vmem>>, %arg3: memref<9x512xf32, #tpu.memory_space<vmem>>, %arg4: memref<8x72xbf16, #tpu.memory_space<vmem>>, %arg5: memref<8x1xf32, #tpu.memory_space<vmem>>, %arg6: memref<8x72xbf16, #tpu.memory_space<vmem>>, %arg7: memref<8x1xf32, #tpu.memory_space<vmem>>, %arg8: memref<16x8xbf16, #tpu.memory_space<vmem>>, %arg9: memref<16x1xf32, #tpu.memory_space<vmem>>, %arg10: memref<4x3x512xf32, #tpu.memory_space<vmem>>, %arg11: memref<16x512xf32, #tpu.memory_space<vmem>>) attributes {dimension_semantics = [#tpu.dimension_semantics<parallel>], iteration_bounds = array<i64: 1>, scalar_prefetch = 0 : i64, scratch_operands = 0 : i64, tpu.core_type = #tpu.core_type<tc>, window_params = [{transform_indices = @transform_0, window_bounds = array<i64: 8, 512>}, {pipeline_mode = #tpu.pipeline_mode<synchronous>, transform_indices = @transform_1, window_bounds = array<i64: 8, 1>}, {pipeline_mode = #tpu.pipeline_mode<synchronous>, transform_indices = @transform_2, window_bounds = array<i64: 9, 512>}, {pipeline_mode = #tpu.pipeline_mode<synchronous>, transform_indices = @transform_3, window_bounds = array<i64: 8, 72>}, {pipeline_mode = #tpu.pipeline_mode<synchronous>, transform_indices = @transform_4, window_bounds = array<i64: 8, 1>}, {pipeline_mode = #tpu.pipeline_mode<synchronous>, transform_indices = @transform_5, window_bounds = array<i64: 8, 72>}, {pipeline_mode = #tpu.pipeline_mode<synchronous>, transform_indices = @transform_6, window_bounds = array<i64: 8, 1>}, {pipeline_mode = #tpu.pipeline_mode<synchronous>, transform_indices = @transform_7, window_bounds = array<i64: 16, 8>}, {pipeline_mode = #tpu.pipeline_mode<synchronous>, transform_indices = @transform_8, window_bounds = array<i64: 16, 1>}, {pipeline_mode = #tpu.pipeline_mode<synchronous>, transform_indices = @transform_9, window_bounds = array<i64: 4, 3, 512>}, {transform_indices = @transform_10, window_bounds = array<i64: 16, 512>}]} {
    %c0 = arith.constant 0 : index
    %c0_0 = arith.constant 0 : index
    %0 = vector.load %arg3[%c0, %c0_0] : memref<9x512xf32, #tpu.memory_space<vmem>>, vector<9x512xf32>
    %c0_1 = arith.constant 0 : index
    %c0_2 = arith.constant 0 : index
    %1 = vector.load %arg1[%c0_1, %c0_2] : memref<8x512xf32, #tpu.memory_space<vmem>>, vector<8x512xf32>
    %c0_3 = arith.constant 0 : index
    %c0_4 = arith.constant 0 : index
    %2 = vector.load %arg2[%c0_3, %c0_4] : memref<8x1xf32, #tpu.memory_space<vmem>>, vector<8x1xf32>
    %3 = vector.broadcast %2 : vector<8x1xf32> to vector<8x512xf32>
    %4 = arith.subf %1, %3 : vector<8x512xf32>
    %c17_i32 = arith.constant 17 : i32
    %5 = tpu.dynamic_rotate %4 by %c17_i32 dim 1 : vector<8x512xf32>, i32 -> vector<8x512xf32>
    %6 = vector.extract_strided_slice %0 {offsets = [0, 0], sizes = [1, 512], strides = [1, 1]} : vector<9x512xf32> to vector<1x512xf32>
    %7 = vector.broadcast %6 : vector<1x512xf32> to vector<8x512xf32>
    %8 = arith.mulf %5, %7 : vector<8x512xf32>
    %c16_i32 = arith.constant 16 : i32
    %9 = tpu.dynamic_rotate %4 by %c16_i32 dim 1 : vector<8x512xf32>, i32 -> vector<8x512xf32>
    %10 = vector.extract_strided_slice %0 {offsets = [1, 0], sizes = [1, 512], strides = [1, 1]} : vector<9x512xf32> to vector<1x512xf32>
    %11 = vector.broadcast %10 : vector<1x512xf32> to vector<8x512xf32>
    %12 = arith.mulf %9, %11 : vector<8x512xf32>
    %c15_i32 = arith.constant 15 : i32
    %13 = tpu.dynamic_rotate %4 by %c15_i32 dim 1 : vector<8x512xf32>, i32 -> vector<8x512xf32>
    %14 = vector.extract_strided_slice %0 {offsets = [2, 0], sizes = [1, 512], strides = [1, 1]} : vector<9x512xf32> to vector<1x512xf32>
    %15 = vector.broadcast %14 : vector<1x512xf32> to vector<8x512xf32>
    %16 = arith.mulf %13, %15 : vector<8x512xf32>
    %c1_i32 = arith.constant 1 : i32
    %17 = tpu.dynamic_rotate %4 by %c1_i32 dim 1 : vector<8x512xf32>, i32 -> vector<8x512xf32>
    %18 = vector.extract_strided_slice %0 {offsets = [3, 0], sizes = [1, 512], strides = [1, 1]} : vector<9x512xf32> to vector<1x512xf32>
    %19 = vector.broadcast %18 : vector<1x512xf32> to vector<8x512xf32>
    %20 = arith.mulf %17, %19 : vector<8x512xf32>
    %21 = vector.extract_strided_slice %0 {offsets = [4, 0], sizes = [1, 512], strides = [1, 1]} : vector<9x512xf32> to vector<1x512xf32>
    %22 = vector.broadcast %21 : vector<1x512xf32> to vector<8x512xf32>
    %23 = arith.mulf %4, %22 : vector<8x512xf32>
    %c511_i32 = arith.constant 511 : i32
    %24 = tpu.dynamic_rotate %4 by %c511_i32 dim 1 : vector<8x512xf32>, i32 -> vector<8x512xf32>
    %25 = vector.extract_strided_slice %0 {offsets = [5, 0], sizes = [1, 512], strides = [1, 1]} : vector<9x512xf32> to vector<1x512xf32>
    %26 = vector.broadcast %25 : vector<1x512xf32> to vector<8x512xf32>
    %27 = arith.mulf %24, %26 : vector<8x512xf32>
    %c497_i32 = arith.constant 497 : i32
    %28 = tpu.dynamic_rotate %4 by %c497_i32 dim 1 : vector<8x512xf32>, i32 -> vector<8x512xf32>
    %29 = vector.extract_strided_slice %0 {offsets = [6, 0], sizes = [1, 512], strides = [1, 1]} : vector<9x512xf32> to vector<1x512xf32>
    %30 = vector.broadcast %29 : vector<1x512xf32> to vector<8x512xf32>
    %31 = arith.mulf %28, %30 : vector<8x512xf32>
    %c496_i32 = arith.constant 496 : i32
    %32 = tpu.dynamic_rotate %4 by %c496_i32 dim 1 : vector<8x512xf32>, i32 -> vector<8x512xf32>
    %33 = vector.extract_strided_slice %0 {offsets = [7, 0], sizes = [1, 512], strides = [1, 1]} : vector<9x512xf32> to vector<1x512xf32>
    %34 = vector.broadcast %33 : vector<1x512xf32> to vector<8x512xf32>
    %35 = arith.mulf %32, %34 : vector<8x512xf32>
    %c495_i32 = arith.constant 495 : i32
    %36 = tpu.dynamic_rotate %4 by %c495_i32 dim 1 : vector<8x512xf32>, i32 -> vector<8x512xf32>
    %37 = vector.extract_strided_slice %0 {offsets = [8, 0], sizes = [1, 512], strides = [1, 1]} : vector<9x512xf32> to vector<1x512xf32>
    %38 = vector.broadcast %37 : vector<1x512xf32> to vector<8x512xf32>
    %39 = arith.mulf %36, %38 : vector<8x512xf32>
    %40 = tpu.concatenate %8, %12, %16, %20, %23, %27, %31, %35, %39 in 0 : vector<8x512xf32>, vector<8x512xf32>, vector<8x512xf32>, vector<8x512xf32>, vector<8x512xf32>, vector<8x512xf32>, vector<8x512xf32>, vector<8x512xf32>, vector<8x512xf32> -> vector<72x512xf32>
    %41 = arith.truncf %40 : vector<72x512xf32> to vector<72x512xbf16>
    %c0_5 = arith.constant 0 : index
    %c0_6 = arith.constant 0 : index
    %42 = vector.load %arg4[%c0_5, %c0_6] : memref<8x72xbf16, #tpu.memory_space<vmem>>, vector<8x72xbf16>
    %cst = arith.constant dense<0.000000e+00> : vector<8x512xf32>
    %43 = tpu.matmul %42, %41, %cst {dimension_numbers = #tpu.dot_dimension_numbers<[1], [0], [0], [1], [0, 0, 1, 1], [], []>} : vector<8x72xbf16>, vector<72x512xbf16>, vector<8x512xf32> -> vector<8x512xf32>
    %c0_7 = arith.constant 0 : index
    %c0_8 = arith.constant 0 : index
    %44 = vector.load %arg5[%c0_7, %c0_8] : memref<8x1xf32, #tpu.memory_space<vmem>>, vector<8x1xf32>
    %45 = vector.broadcast %44 : vector<8x1xf32> to vector<8x512xf32>
    %46 = arith.addf %43, %45 : vector<8x512xf32>
    %cst_9 = arith.constant 0.000000e+00 : f32
    %47 = vector.broadcast %cst_9 : f32 to vector<8x512xf32>
    %48 = arith.maximumf %46, %47 : vector<8x512xf32>
    %c17_i32_10 = arith.constant 17 : i32
    %49 = tpu.dynamic_rotate %48 by %c17_i32_10 dim 1 : vector<8x512xf32>, i32 -> vector<8x512xf32>
    %50 = vector.extract_strided_slice %0 {offsets = [0, 0], sizes = [1, 512], strides = [1, 1]} : vector<9x512xf32> to vector<1x512xf32>
    %51 = vector.broadcast %50 : vector<1x512xf32> to vector<8x512xf32>
    %52 = arith.mulf %49, %51 : vector<8x512xf32>
    %c16_i32_11 = arith.constant 16 : i32
    %53 = tpu.dynamic_rotate %48 by %c16_i32_11 dim 1 : vector<8x512xf32>, i32 -> vector<8x512xf32>
    %54 = vector.extract_strided_slice %0 {offsets = [1, 0], sizes = [1, 512], strides = [1, 1]} : vector<9x512xf32> to vector<1x512xf32>
    %55 = vector.broadcast %54 : vector<1x512xf32> to vector<8x512xf32>
    %56 = arith.mulf %53, %55 : vector<8x512xf32>
    %c15_i32_12 = arith.constant 15 : i32
    %57 = tpu.dynamic_rotate %48 by %c15_i32_12 dim 1 : vector<8x512xf32>, i32 -> vector<8x512xf32>
    %58 = vector.extract_strided_slice %0 {offsets = [2, 0], sizes = [1, 512], strides = [1, 1]} : vector<9x512xf32> to vector<1x512xf32>
    %59 = vector.broadcast %58 : vector<1x512xf32> to vector<8x512xf32>
    %60 = arith.mulf %57, %59 : vector<8x512xf32>
    %c1_i32_13 = arith.constant 1 : i32
    %61 = tpu.dynamic_rotate %48 by %c1_i32_13 dim 1 : vector<8x512xf32>, i32 -> vector<8x512xf32>
    %62 = vector.extract_strided_slice %0 {offsets = [3, 0], sizes = [1, 512], strides = [1, 1]} : vector<9x512xf32> to vector<1x512xf32>
    %63 = vector.broadcast %62 : vector<1x512xf32> to vector<8x512xf32>
    %64 = arith.mulf %61, %63 : vector<8x512xf32>
    %65 = vector.extract_strided_slice %0 {offsets = [4, 0], sizes = [1, 512], strides = [1, 1]} : vector<9x512xf32> to vector<1x512xf32>
    %66 = vector.broadcast %65 : vector<1x512xf32> to vector<8x512xf32>
    %67 = arith.mulf %48, %66 : vector<8x512xf32>
    %c511_i32_14 = arith.constant 511 : i32
    %68 = tpu.dynamic_rotate %48 by %c511_i32_14 dim 1 : vector<8x512xf32>, i32 -> vector<8x512xf32>
    %69 = vector.extract_strided_slice %0 {offsets = [5, 0], sizes = [1, 512], strides = [1, 1]} : vector<9x512xf32> to vector<1x512xf32>
    %70 = vector.broadcast %69 : vector<1x512xf32> to vector<8x512xf32>
    %71 = arith.mulf %68, %70 : vector<8x512xf32>
    %c497_i32_15 = arith.constant 497 : i32
    %72 = tpu.dynamic_rotate %48 by %c497_i32_15 dim 1 : vector<8x512xf32>, i32 -> vector<8x512xf32>
    %73 = vector.extract_strided_slice %0 {offsets = [6, 0], sizes = [1, 512], strides = [1, 1]} : vector<9x512xf32> to vector<1x512xf32>
    %74 = vector.broadcast %73 : vector<1x512xf32> to vector<8x512xf32>
    %75 = arith.mulf %72, %74 : vector<8x512xf32>
    %c496_i32_16 = arith.constant 496 : i32
    %76 = tpu.dynamic_rotate %48 by %c496_i32_16 dim 1 : vector<8x512xf32>, i32 -> vector<8x512xf32>
    %77 = vector.extract_strided_slice %0 {offsets = [7, 0], sizes = [1, 512], strides = [1, 1]} : vector<9x512xf32> to vector<1x512xf32>
    %78 = vector.broadcast %77 : vector<1x512xf32> to vector<8x512xf32>
    %79 = arith.mulf %76, %78 : vector<8x512xf32>
    %c495_i32_17 = arith.constant 495 : i32
    %80 = tpu.dynamic_rotate %48 by %c495_i32_17 dim 1 : vector<8x512xf32>, i32 -> vector<8x512xf32>
    %81 = vector.extract_strided_slice %0 {offsets = [8, 0], sizes = [1, 512], strides = [1, 1]} : vector<9x512xf32> to vector<1x512xf32>
    %82 = vector.broadcast %81 : vector<1x512xf32> to vector<8x512xf32>
    %83 = arith.mulf %80, %82 : vector<8x512xf32>
    %84 = tpu.concatenate %52, %56, %60, %64, %67, %71, %75, %79, %83 in 0 : vector<8x512xf32>, vector<8x512xf32>, vector<8x512xf32>, vector<8x512xf32>, vector<8x512xf32>, vector<8x512xf32>, vector<8x512xf32>, vector<8x512xf32>, vector<8x512xf32> -> vector<72x512xf32>
    %85 = arith.truncf %84 : vector<72x512xf32> to vector<72x512xbf16>
    %c0_18 = arith.constant 0 : index
    %c0_19 = arith.constant 0 : index
    %86 = vector.load %arg6[%c0_18, %c0_19] : memref<8x72xbf16, #tpu.memory_space<vmem>>, vector<8x72xbf16>
    %cst_20 = arith.constant dense<0.000000e+00> : vector<8x512xf32>
    %87 = tpu.matmul %86, %85, %cst_20 {dimension_numbers = #tpu.dot_dimension_numbers<[1], [0], [0], [1], [0, 0, 1, 1], [], []>} : vector<8x72xbf16>, vector<72x512xbf16>, vector<8x512xf32> -> vector<8x512xf32>
    %c0_21 = arith.constant 0 : index
    %c0_22 = arith.constant 0 : index
    %88 = vector.load %arg7[%c0_21, %c0_22] : memref<8x1xf32, #tpu.memory_space<vmem>>, vector<8x1xf32>
    %89 = vector.broadcast %88 : vector<8x1xf32> to vector<8x512xf32>
    %90 = arith.addf %87, %89 : vector<8x512xf32>
    %cst_23 = arith.constant 0.000000e+00 : f32
    %91 = vector.broadcast %cst_23 : f32 to vector<8x512xf32>
    %92 = arith.maximumf %90, %91 : vector<8x512xf32>
    %c0_24 = arith.constant 0 : index
    %c0_25 = arith.constant 0 : index
    %93 = vector.load %arg8[%c0_24, %c0_25] : memref<16x8xbf16, #tpu.memory_space<vmem>>, vector<16x8xbf16>
    %94 = arith.truncf %92 : vector<8x512xf32> to vector<8x512xbf16>
    %cst_26 = arith.constant dense<0.000000e+00> : vector<16x512xf32>
    %95 = tpu.matmul %93, %94, %cst_26 {dimension_numbers = #tpu.dot_dimension_numbers<[1], [0], [0], [1], [0, 0, 1, 1], [], []>} : vector<16x8xbf16>, vector<8x512xbf16>, vector<16x512xf32> -> vector<16x512xf32>
    %c0_27 = arith.constant 0 : index
    %c0_28 = arith.constant 0 : index
    %96 = vector.load %arg9[%c0_27, %c0_28] : memref<16x1xf32, #tpu.memory_space<vmem>>, vector<16x1xf32>
    %97 = vector.broadcast %96 : vector<16x1xf32> to vector<16x512xf32>
    %98 = arith.addf %95, %97 : vector<16x512xf32>
    %99 = vector.extract_strided_slice %98 {offsets = [0, 0], sizes = [3, 512], strides = [1, 1]} : vector<16x512xf32> to vector<3x512xf32>
    %100 = vector.extract_strided_slice %98 {offsets = [3, 0], sizes = [3, 512], strides = [1, 1]} : vector<16x512xf32> to vector<3x512xf32>
    %101 = vector.extract_strided_slice %98 {offsets = [6, 0], sizes = [3, 512], strides = [1, 1]} : vector<16x512xf32> to vector<3x512xf32>
    %102 = vector.extract_strided_slice %98 {offsets = [9, 0], sizes = [3, 512], strides = [1, 1]} : vector<16x512xf32> to vector<3x512xf32>
    %103 = vector.extract_strided_slice %98 {offsets = [12, 0], sizes = [3, 512], strides = [1, 1]} : vector<16x512xf32> to vector<3x512xf32>
    %c0_29 = arith.constant 0 : index
    %c0_30 = arith.constant 0 : index
    %c0_31 = arith.constant 0 : index
    %104 = vector.load %arg10[%c0_29, %c0_30, %c0_31] : memref<4x3x512xf32, #tpu.memory_space<vmem>>, vector<1x3x512xf32>
    %105 = vector.shape_cast %104 : vector<1x3x512xf32> to vector<3x512xf32>
    %c1 = arith.constant 1 : index
    %c0_32 = arith.constant 0 : index
    %c0_33 = arith.constant 0 : index
    %106 = vector.load %arg10[%c1, %c0_32, %c0_33] : memref<4x3x512xf32, #tpu.memory_space<vmem>>, vector<1x3x512xf32>
    %107 = vector.shape_cast %106 : vector<1x3x512xf32> to vector<3x512xf32>
    %c2 = arith.constant 2 : index
    %c0_34 = arith.constant 0 : index
    %c0_35 = arith.constant 0 : index
    %108 = vector.load %arg10[%c2, %c0_34, %c0_35] : memref<4x3x512xf32, #tpu.memory_space<vmem>>, vector<1x3x512xf32>
    %109 = vector.shape_cast %108 : vector<1x3x512xf32> to vector<3x512xf32>
    %c3 = arith.constant 3 : index
    %c0_36 = arith.constant 0 : index
    %c0_37 = arith.constant 0 : index
    %110 = vector.load %arg10[%c3, %c0_36, %c0_37] : memref<4x3x512xf32, #tpu.memory_space<vmem>>, vector<1x3x512xf32>
    %111 = vector.shape_cast %110 : vector<1x3x512xf32> to vector<3x512xf32>
    %cst_38 = arith.constant 4.13516665 : f32
    %112 = vector.broadcast %cst_38 : f32 to vector<3x512xf32>
    %113 = arith.minimumf %102, %112 : vector<3x512xf32>
    %cst_39 = arith.constant 4.13516665 : f32
    %114 = vector.broadcast %cst_39 : f32 to vector<3x512xf32>
    %115 = arith.minimumf %103, %114 : vector<3x512xf32>
    %116 = arith.mulf %100, %109 : vector<3x512xf32>
    %117 = arith.addf %116, %105 : vector<3x512xf32>
    %118 = arith.mulf %101, %111 : vector<3x512xf32>
    %119 = arith.addf %118, %107 : vector<3x512xf32>
    %120 = math.exp %113 : vector<3x512xf32>
    %121 = arith.mulf %120, %109 : vector<3x512xf32>
    %122 = math.exp %115 : vector<3x512xf32>
    %123 = arith.mulf %122, %111 : vector<3x512xf32>
    %cst_40 = arith.constant 5.000000e-01 : f32
    %124 = vector.broadcast %cst_40 : f32 to vector<3x512xf32>
    %125 = arith.mulf %124, %121 : vector<3x512xf32>
    %126 = arith.subf %117, %125 : vector<3x512xf32>
    %cst_41 = arith.constant 5.000000e-01 : f32
    %127 = vector.broadcast %cst_41 : f32 to vector<3x512xf32>
    %128 = arith.mulf %127, %123 : vector<3x512xf32>
    %129 = arith.subf %119, %128 : vector<3x512xf32>
    %cst_42 = arith.constant 5.000000e-01 : f32
    %130 = vector.broadcast %cst_42 : f32 to vector<3x512xf32>
    %131 = arith.mulf %130, %121 : vector<3x512xf32>
    %132 = arith.addf %117, %131 : vector<3x512xf32>
    %cst_43 = arith.constant 5.000000e-01 : f32
    %133 = vector.broadcast %cst_43 : f32 to vector<3x512xf32>
    %134 = arith.mulf %133, %123 : vector<3x512xf32>
    %135 = arith.addf %119, %134 : vector<3x512xf32>
    %cst_44 = arith.constant 0.000000e+00 : f32
    %cst_45 = arith.constant 1.600000e+01 : f32
    %136 = vector.broadcast %cst_44 : f32 to vector<3x512xf32>
    %137 = arith.maximumf %136, %126 : vector<3x512xf32>
    %138 = vector.broadcast %cst_45 : f32 to vector<3x512xf32>
    %139 = arith.minimumf %138, %137 : vector<3x512xf32>
    %cst_46 = arith.constant 2.000000e+00 : f32
    %140 = vector.broadcast %cst_46 : f32 to vector<3x512xf32>
    %141 = arith.mulf %139, %140 : vector<3x512xf32>
    %cst_47 = arith.constant 0.000000e+00 : f32
    %cst_48 = arith.constant 3.200000e+01 : f32
    %142 = vector.broadcast %cst_47 : f32 to vector<3x512xf32>
    %143 = arith.maximumf %142, %141 : vector<3x512xf32>
    %144 = vector.broadcast %cst_48 : f32 to vector<3x512xf32>
    %145 = arith.minimumf %144, %143 : vector<3x512xf32>
    %cst_49 = arith.constant 0.000000e+00 : f32
    %cst_50 = arith.constant 1.600000e+01 : f32
    %146 = vector.broadcast %cst_49 : f32 to vector<3x512xf32>
    %147 = arith.maximumf %146, %132 : vector<3x512xf32>
    %148 = vector.broadcast %cst_50 : f32 to vector<3x512xf32>
    %149 = arith.minimumf %148, %147 : vector<3x512xf32>
    %cst_51 = arith.constant 2.000000e+00 : f32
    %150 = vector.broadcast %cst_51 : f32 to vector<3x512xf32>
    %151 = arith.mulf %149, %150 : vector<3x512xf32>
    %cst_52 = arith.constant 0.000000e+00 : f32
    %cst_53 = arith.constant 3.200000e+01 : f32
    %152 = vector.broadcast %cst_52 : f32 to vector<3x512xf32>
    %153 = arith.maximumf %152, %151 : vector<3x512xf32>
    %154 = vector.broadcast %cst_53 : f32 to vector<3x512xf32>
    %155 = arith.minimumf %154, %153 : vector<3x512xf32>
    %cst_54 = arith.constant 0.000000e+00 : f32
    %cst_55 = arith.constant 1.600000e+01 : f32
    %156 = vector.broadcast %cst_54 : f32 to vector<3x512xf32>
    %157 = arith.maximumf %156, %129 : vector<3x512xf32>
    %158 = vector.broadcast %cst_55 : f32 to vector<3x512xf32>
    %159 = arith.minimumf %158, %157 : vector<3x512xf32>
    %cst_56 = arith.constant 2.000000e+00 : f32
    %160 = vector.broadcast %cst_56 : f32 to vector<3x512xf32>
    %161 = arith.mulf %159, %160 : vector<3x512xf32>
    %cst_57 = arith.constant 0.000000e+00 : f32
    %cst_58 = arith.constant 3.200000e+01 : f32
    %162 = vector.broadcast %cst_57 : f32 to vector<3x512xf32>
    %163 = arith.maximumf %162, %161 : vector<3x512xf32>
    %164 = vector.broadcast %cst_58 : f32 to vector<3x512xf32>
    %165 = arith.minimumf %164, %163 : vector<3x512xf32>
    %cst_59 = arith.constant 0.000000e+00 : f32
    %cst_60 = arith.constant 1.600000e+01 : f32
    %166 = vector.broadcast %cst_59 : f32 to vector<3x512xf32>
    %167 = arith.maximumf %166, %135 : vector<3x512xf32>
    %168 = vector.broadcast %cst_60 : f32 to vector<3x512xf32>
    %169 = arith.minimumf %168, %167 : vector<3x512xf32>
    %cst_61 = arith.constant 2.000000e+00 : f32
    %170 = vector.broadcast %cst_61 : f32 to vector<3x512xf32>
    %171 = arith.mulf %169, %170 : vector<3x512xf32>
    %cst_62 = arith.constant 0.000000e+00 : f32
    %cst_63 = arith.constant 3.200000e+01 : f32
    %172 = vector.broadcast %cst_62 : f32 to vector<3x512xf32>
    %173 = arith.maximumf %172, %171 : vector<3x512xf32>
    %174 = vector.broadcast %cst_63 : f32 to vector<3x512xf32>
    %175 = arith.minimumf %174, %173 : vector<3x512xf32>
    %cst_64 = arith.constant 0.000000e+00 : f32
    %176 = vector.broadcast %cst_64 : f32 to vector<1x512xf32>
    %177 = tpu.concatenate %99, %145, %165, %155, %175, %176 in 0 : vector<3x512xf32>, vector<3x512xf32>, vector<3x512xf32>, vector<3x512xf32>, vector<3x512xf32>, vector<1x512xf32> -> vector<16x512xf32>
    %c0_65 = arith.constant 0 : index
    %c0_66 = arith.constant 0 : index
    %178 = vector.load %arg11[%c0_65, %c0_66] : memref<16x512xf32, #tpu.memory_space<vmem>>, vector<16x512xf32>
    tpu.vector_store %arg11[%c0_65, %c0_66], %177 {strides = array<i32>} : memref<16x512xf32, #tpu.memory_space<vmem>>, vector<16x512xf32>,
    return
  }
  func.func @transform_0(%arg0: i32) -> (i32, i32) {
    %c0_i32 = arith.constant 0 : i32
    %c0_i32_0 = arith.constant 0 : i32
    return %c0_i32, %arg0 : i32, i32
  }
  func.func @transform_1(%arg0: i32) -> (i32, i32) {
    %c0_i32 = arith.constant 0 : i32
    %c0_i32_0 = arith.constant 0 : i32
    %c0_i32_1 = arith.constant 0 : i32
    return %c0_i32, %c0_i32_0 : i32, i32
  }
  func.func @transform_2(%arg0: i32) -> (i32, i32) {
    %c0_i32 = arith.constant 0 : i32
    %c0_i32_0 = arith.constant 0 : i32
    %c0_i32_1 = arith.constant 0 : i32
    return %c0_i32, %c0_i32_0 : i32, i32
  }
  func.func @transform_3(%arg0: i32) -> (i32, i32) {
    %c0_i32 = arith.constant 0 : i32
    %c0_i32_0 = arith.constant 0 : i32
    %c0_i32_1 = arith.constant 0 : i32
    return %c0_i32, %c0_i32_0 : i32, i32
  }
  func.func @transform_4(%arg0: i32) -> (i32, i32) {
    %c0_i32 = arith.constant 0 : i32
    %c0_i32_0 = arith.constant 0 : i32
    %c0_i32_1 = arith.constant 0 : i32
    return %c0_i32, %c0_i32_0 : i32, i32
  }
  func.func @transform_5(%arg0: i32) -> (i32, i32) {
    %c0_i32 = arith.constant 0 : i32
    %c0_i32_0 = arith.constant 0 : i32
    %c0_i32_1 = arith.constant 0 : i32
    return %c0_i32, %c0_i32_0 : i32, i32
  }
  func.func @transform_6(%arg0: i32) -> (i32, i32) {
    %c0_i32 = arith.constant 0 : i32
    %c0_i32_0 = arith.constant 0 : i32
    %c0_i32_1 = arith.constant 0 : i32
    return %c0_i32, %c0_i32_0 : i32, i32
  }
  func.func @transform_7(%arg0: i32) -> (i32, i32) {
    %c0_i32 = arith.constant 0 : i32
    %c0_i32_0 = arith.constant 0 : i32
    %c0_i32_1 = arith.constant 0 : i32
    return %c0_i32, %c0_i32_0 : i32, i32
  }
  func.func @transform_8(%arg0: i32) -> (i32, i32) {
    %c0_i32 = arith.constant 0 : i32
    %c0_i32_0 = arith.constant 0 : i32
    %c0_i32_1 = arith.constant 0 : i32
    return %c0_i32, %c0_i32_0 : i32, i32
  }
  func.func @transform_9(%arg0: i32) -> (i32, i32, i32) {
    %c0_i32 = arith.constant 0 : i32
    %c0_i32_0 = arith.constant 0 : i32
    %c0_i32_1 = arith.constant 0 : i32
    %c0_i32_2 = arith.constant 0 : i32
    return %c0_i32, %c0_i32_0, %c0_i32_1 : i32, i32, i32
  }
  func.func @transform_10(%arg0: i32) -> (i32, i32) {
    %c0_i32 = arith.constant 0 : i32
    %c0_i32_0 = arith.constant 0 : i32
    return %c0_i32, %arg0 : i32, i32
  }
}

</mosaic_0001>

<llo_original>
// kernel: tpu_custom_call.1
$region0: #{tpu_custom_call.1}
  #allocation0 [shape = 'u32[]', space=smem, size = 0x4, offset = 0x4, fixed_abs, tag = 'smem constant byte address 0x4 - core index']
  #allocation1 [shape = 'u32[72,128]{1,0:T(1,128)}', space=vmem, size = 0x9000, scoped, tag = 'internal scratch']
  %s0 = inlined_call_operand.vmem [shape: f32[8,512], index: 0, kind: input, shape index: {}]
  %s1 = inlined_call_operand.vmem [shape: f32[8,1], index: 1, kind: input, shape index: {}]
  %s2 = inlined_call_operand.vmem [shape: f32[9,512], index: 2, kind: input, shape index: {}]
  %s3 = inlined_call_operand.vmem [shape: bf16[8,72], index: 3, kind: input, shape index: {}]
  %s4 = inlined_call_operand.vmem [shape: f32[8,1], index: 4, kind: input, shape index: {}]
  %s5 = inlined_call_operand.vmem [shape: bf16[8,72], index: 5, kind: input, shape index: {}]
  %s6 = inlined_call_operand.vmem [shape: f32[8,1], index: 6, kind: input, shape index: {}]
  %s7 = inlined_call_operand.vmem [shape: bf16[16,8], index: 7, kind: input, shape index: {}]
  %s8 = inlined_call_operand.vmem [shape: f32[16,1], index: 8, kind: input, shape index: {}]
  %s9 = inlined_call_operand.vmem [shape: f32[4,3,512], index: 9, kind: input, shape index: {}]
  %s10 = inlined_call_operand.hbm [shape: f32[16,512], index: 10, kind: output, shape index: {}]
  %s11 = sld [smem:[#allocation0]]
  $region50: #{tpu_custom_call.1} parent=0
    _
  %s13 = ssub.s32 1, %s11
  %s14 = scalar_select 0, %s13, %s11
  $region1: #{tpu_custom_call.1} parent=0
    #allocation2 [shape = 'u8[32768]{0}', space=vmem, size = 0x8000, scoped, tag = 'output window, operand 0, single buffered']
    #allocation3 [shape = 's32[1]{0}', space=sflag, size = 0x4, scoped, tag = 'scoped memory for tpu_custom_call.1']
    %15 = vsyncpa [#allocation3], 0
    // Predicated region
    $region2: #{tpu_custom_call.1} parent=1 // pred_check
      _
    $region3: #{tpu_custom_call.1} parent=1 // pred_check_branch
      %17 = sbr.rel (0) target = $region5
    $region4: #{tpu_custom_call.1} parent=1 // pred_region
      _
    $region5: #{tpu_custom_call.1} parent=1 // pred_fallthru
      _
    // Predicated region
    $region6: #{tpu_custom_call.1} parent=1 // pred_check
      _
    $region7: #{tpu_custom_call.1} parent=1 // pred_check_branch
      %19 = sbr.rel (0) target = $region9
    $region8: #{tpu_custom_call.1} parent=1 // pred_region
      _
    $region9: #{tpu_custom_call.1} parent=1 // pred_fallthru
      _
    // Predicated region
    $region10: #{tpu_custom_call.1} parent=1 // pred_check
      _
    $region11: #{tpu_custom_call.1} parent=1 // pred_check_branch
      %21 = sbr.rel (0) target = $region13
    $region12: #{tpu_custom_call.1} parent=1 // pred_region
      _
    $region13: #{tpu_custom_call.1} parent=1 // pred_fallthru
      _
    // Predicated region
    $region14: #{tpu_custom_call.1} parent=1 // pred_check
      _
    $region15: #{tpu_custom_call.1} parent=1 // pred_check_branch
      %23 = sbr.rel (0) target = $region17
    $region16: #{tpu_custom_call.1} parent=1 // pred_region
      _
    $region17: #{tpu_custom_call.1} parent=1 // pred_fallthru
      _
    // Predicated region
    $region18: #{tpu_custom_call.1} parent=1 // pred_check
      _
    $region19: #{tpu_custom_call.1} parent=1 // pred_check_branch
      %25 = sbr.rel (0) target = $region21
    $region20: #{tpu_custom_call.1} parent=1 // pred_region
      _
    $region21: #{tpu_custom_call.1} parent=1 // pred_fallthru
      _
    // Predicated region
    $region22: #{tpu_custom_call.1} parent=1 // pred_check
      _
    $region23: #{tpu_custom_call.1} parent=1 // pred_check_branch
      %27 = sbr.rel (0) target = $region25
    $region24: #{tpu_custom_call.1} parent=1 // pred_region
      _
    $region25: #{tpu_custom_call.1} parent=1 // pred_fallthru
      _
    // Predicated region
    $region26: #{tpu_custom_call.1} parent=1 // pred_check
      _
    $region27: #{tpu_custom_call.1} parent=1 // pred_check_branch
      %29 = sbr.rel (0) target = $region29
    $region28: #{tpu_custom_call.1} parent=1 // pred_region
      _
    $region29: #{tpu_custom_call.1} parent=1 // pred_fallthru
      _
    // Predicated region
    $region30: #{tpu_custom_call.1} parent=1 // pred_check
      _
    $region31: #{tpu_custom_call.1} parent=1 // pred_check_branch
      %31 = sbr.rel (0) target = $region33
    $region32: #{tpu_custom_call.1} parent=1 // pred_region
      _
    $region33: #{tpu_custom_call.1} parent=1 // pred_fallthru
      _
    // Predicated region
    $region34: #{tpu_custom_call.1} parent=1 // pred_check
      _
    $region35: #{tpu_custom_call.1} parent=1 // pred_check_branch
      %33 = sbr.rel (0) target = $region37
    $region36: #{tpu_custom_call.1} parent=1 // pred_region
      _
    $region37: #{tpu_custom_call.1} parent=1 // pred_fallthru
      _
    // Predicated region
    $region38: #{tpu_custom_call.1} parent=1 // pred_check
      _
    $region39: #{tpu_custom_call.1} parent=1 // pred_check_branch
      %35 = sbr.rel (0) target = $region41
    $region40: #{tpu_custom_call.1} parent=1 // pred_region
      _
    $region41: #{tpu_custom_call.1} parent=1 // pred_fallthru
      _
    %v37 = vld [vmem:[%s2] sm:$0xff]
    %v38 = vld [vmem:[%s2 + $0x8] sm:$0xff]
    %v39 = vld [vmem:[%s2 + $0x10] sm:$0xff]
    %v40 = vld [vmem:[%s2 + $0x18] sm:$0xff]
    %v41 = vld [vmem:[%s2 + $0x20] sm:$0x1]
    %v42 = vld [vmem:[%s2 + $0x28] sm:$0x1]
    %v43 = vld [vmem:[%s2 + $0x30] sm:$0x1]
    %v44 = vld [vmem:[%s2 + $0x38] sm:$0x1]
    %v45 = vld [vmem:[%s0] sm:$0xff]
    %v46 = vld [vmem:[%s0 + $0x8] sm:$0xff]
    %v47 = vld [vmem:[%s0 + $0x10] sm:$0xff]
    %v48 = vld [vmem:[%s0 + $0x18] sm:$0xff]
    %v49 = vld [vmem:[%s1] sm:$0xff]
    %51 = vset.pattern.permute.xlu0 0
    %52 = vperm.xlu0 %51, %v49
    %v53 = vpop.permute.xlu0 %52
    %v55 = vsub.f32 %v45, %v53
    %v56 = vsub.f32 %v46, %v53
    %v57 = vsub.f32 %v47, %v53
    %v58 = vsub.f32 %v48, %v53
    %59 = vrot.lane.b32.xlu0 %v55, 17
    %v60 = vpop.permute.xlu0 %59
    %61 = vrot.lane.b32.xlu0 %v56, 17
    %v62 = vpop.permute.xlu0 %61
    %63 = vrot.lane.b32.xlu0 %v57, 17
    %v64 = vpop.permute.xlu0 %63
    %65 = vrot.lane.b32.xlu0 %v58, 17
    %v66 = vpop.permute.xlu0 %65
    %v67 = vlaneseq
    %v68 = vand.u32 %v67, 127
    %vm69 = vcmp.lt.s32.totalorder %v68, 17
    %v70 = vsel %vm69, %v64, %v66
    %v71 = vsel %vm69, %v62, %v64
    %v72 = vsel %vm69, %v60, %v62
    %v73 = vsel %vm69, %v66, %v60
    %v74 = vperm.slane %v37, 0
    %v75 = vperm.slane %v38, 0
    %v76 = vperm.slane %v39, 0
    %v77 = vperm.slane %v40, 0
    %v78 = vmul.f32 %v73, %v74
    %v79 = vmul.f32 %v72, %v75
    %v80 = vmul.f32 %v71, %v76
    %v81 = vmul.f32 %v70, %v77
    %82 = vrot.lane.b32.xlu0 %v55, 16
    %v83 = vpop.permute.xlu0 %82
    %84 = vrot.lane.b32.xlu0 %v56, 16
    %v85 = vpop.permute.xlu0 %84
    %86 = vrot.lane.b32.xlu0 %v57, 16
    %v87 = vpop.permute.xlu0 %86
    %88 = vrot.lane.b32.xlu0 %v58, 16
    %v89 = vpop.permute.xlu0 %88
    %vm90 = vcmp.lt.s32.totalorder %v68, 16
    %v91 = vsel %vm90, %v87, %v89
    %v92 = vsel %vm90, %v85, %v87
    %v93 = vsel %vm90, %v83, %v85
    %v94 = vsel %vm90, %v89, %v83
    %v95 = vperm.slane %v37, 1
    %v96 = vperm.slane %v38, 1
    %v97 = vperm.slane %v39, 1
    %v98 = vperm.slane %v40, 1
    %v99 = vmul.f32 %v94, %v95
    %v100 = vmul.f32 %v93, %v96
    %v101 = vmul.f32 %v92, %v97
    %v102 = vmul.f32 %v91, %v98
    %103 = vrot.lane.b32.xlu0 %v55, 15
    %v104 = vpop.permute.xlu0 %103
    %105 = vrot.lane.b32.xlu0 %v56, 15
    %v106 = vpop.permute.xlu0 %105
    %107 = vrot.lane.b32.xlu0 %v57, 15
    %v108 = vpop.permute.xlu0 %107
    %109 = vrot.lane.b32.xlu0 %v58, 15
    %v110 = vpop.permute.xlu0 %109
    %vm111 = vcmp.lt.s32.totalorder %v68, 15
    %v112 = vsel %vm111, %v108, %v110
    %v113 = vsel %vm111, %v106, %v108
    %v114 = vsel %vm111, %v104, %v106
    %v115 = vsel %vm111, %v110, %v104
    %v116 = vperm.slane %v37, 2
    %v117 = vperm.slane %v38, 2
    %v118 = vperm.slane %v39, 2
    %v119 = vperm.slane %v40, 2
    %v120 = vmul.f32 %v115, %v116
    %v121 = vmul.f32 %v114, %v117
    %v122 = vmul.f32 %v113, %v118
    %v123 = vmul.f32 %v112, %v119
    %124 = vrot.lane.b32.xlu0 %v55, 1
    %v125 = vpop.permute.xlu0 %124
    %126 = vrot.lane.b32.xlu0 %v56, 1
    %v127 = vpop.permute.xlu0 %126
    %128 = vrot.lane.b32.xlu0 %v57, 1
    %v129 = vpop.permute.xlu0 %128
    %130 = vrot.lane.b32.xlu0 %v58, 1
    %v131 = vpop.permute.xlu0 %130
    %vm132 = vcmp.lt.s32.totalorder %v68, 1
    %v133 = vsel %vm132, %v129, %v131
    %v134 = vsel %vm132, %v127, %v129
    %v135 = vsel %vm132, %v125, %v127
    %v136 = vsel %vm132, %v131, %v125
    %v137 = vperm.slane %v37, 3
    %v138 = vperm.slane %v38, 3
    %v139 = vperm.slane %v39, 3
    %v140 = vperm.slane %v40, 3
    %v141 = vmul.f32 %v136, %v137
    %v142 = vmul.f32 %v135, %v138
    %v143 = vmul.f32 %v134, %v139
    %v144 = vmul.f32 %v133, %v140
    %v145 = vperm.slane %v37, 4
    %v146 = vperm.slane %v38, 4
    %v147 = vperm.slane %v39, 4
    %v148 = vperm.slane %v40, 4
    %v149 = vmul.f32 %v55, %v145
    %v150 = vmul.f32 %v56, %v146
    %v151 = vmul.f32 %v57, %v147
    %v152 = vmul.f32 %v58, %v148
    %153 = vrot.lane.b32.xlu0 %v55, 127
    %v154 = vpop.permute.xlu0 %153
    %155 = vrot.lane.b32.xlu0 %v56, 127
    %v156 = vpop.permute.xlu0 %155
    %157 = vrot.lane.b32.xlu0 %v57, 127
    %v158 = vpop.permute.xlu0 %157
    %159 = vrot.lane.b32.xlu0 %v58, 127
    %v160 = vpop.permute.xlu0 %159
    %vm161 = vcmp.lt.s32.totalorder %v68, 127
    %v162 = vsel %vm161, %v158, %v160
    %v163 = vsel %vm161, %v156, %v158
    %v164 = vsel %vm161, %v154, %v156
    %v165 = vsel %vm161, %v160, %v154
    %v166 = vperm.slane %v37, 5
    %v167 = vperm.slane %v38, 5
    %v168 = vperm.slane %v39, 5
    %v169 = vperm.slane %v40, 5
    %v170 = vmul.f32 %v164, %v166
    %v171 = vmul.f32 %v163, %v167
    %v172 = vmul.f32 %v162, %v168
    %v173 = vmul.f32 %v165, %v169
    %174 = vrot.lane.b32.xlu0 %v55, 113
    %v175 = vpop.permute.xlu0 %174
    %176 = vrot.lane.b32.xlu0 %v56, 113
    %v177 = vpop.permute.xlu0 %176
    %178 = vrot.lane.b32.xlu0 %v57, 113
    %v179 = vpop.permute.xlu0 %178
    %180 = vrot.lane.b32.xlu0 %v58, 113
    %v181 = vpop.permute.xlu0 %180
    %vm182 = vcmp.lt.s32.totalorder %v68, 113
    %v183 = vsel %vm182, %v179, %v181
    %v184 = vsel %vm182, %v177, %v179
    %v185 = vsel %vm182, %v175, %v177
    %v186 = vsel %vm182, %v181, %v175
    %v187 = vperm.slane %v37, 6
    %v188 = vperm.slane %v38, 6
    %v189 = vperm.slane %v39, 6
    %v190 = vperm.slane %v40, 6
    %v191 = vmul.f32 %v185, %v187
    %v192 = vmul.f32 %v184, %v188
    %v193 = vmul.f32 %v183, %v189
    %v194 = vmul.f32 %v186, %v190
    %195 = vrot.lane.b32.xlu0 %v55, 112
    %v196 = vpop.permute.xlu0 %195
    %197 = vrot.lane.b32.xlu0 %v56, 112
    %v198 = vpop.permute.xlu0 %197
    %199 = vrot.lane.b32.xlu0 %v57, 112
    %v200 = vpop.permute.xlu0 %199
    %201 = vrot.lane.b32.xlu0 %v58, 112
    %v202 = vpop.permute.xlu0 %201
    %vm203 = vcmp.lt.s32.totalorder %v68, 112
    %v204 = vsel %vm203, %v200, %v202
    %v205 = vsel %vm203, %v198, %v200
    %v206 = vsel %vm203, %v196, %v198
    %v207 = vsel %vm203, %v202, %v196
    %v208 = vperm.slane %v37, 7
    %v209 = vperm.slane %v38, 7
    %v210 = vperm.slane %v39, 7
    %v211 = vperm.slane %v40, 7
    %v212 = vmul.f32 %v206, %v208
    %v213 = vmul.f32 %v205, %v209
    %v214 = vmul.f32 %v204, %v210
    %v215 = vmul.f32 %v207, %v211
    %216 = vrot.lane.b32.xlu0 %v55, 111
    %v217 = vpop.permute.xlu0 %216
    %218 = vrot.lane.b32.xlu0 %v56, 111
    %v219 = vpop.permute.xlu0 %218
    %220 = vrot.lane.b32.xlu0 %v57, 111
    %v221 = vpop.permute.xlu0 %220
    %222 = vrot.lane.b32.xlu0 %v58, 111
    %v223 = vpop.permute.xlu0 %222
    %vm224 = vcmp.lt.s32.totalorder %v68, 111
    %v225 = vsel %vm224, %v221, %v223
    %v226 = vsel %vm224, %v219, %v221
    %v227 = vsel %vm224, %v217, %v219
    %v228 = vsel %vm224, %v223, %v217
    %v229 = vperm.slane %v41, 0
    %v230 = vperm.slane %v42, 0
    %v231 = vperm.slane %v43, 0
    %v232 = vperm.slane %v44, 0
    %v233 = vmul.f32 %v227, %v229
    %v234 = vmul.f32 %v226, %v230
    %v235 = vmul.f32 %v225, %v231
    %v236 = vmul.f32 %v228, %v232
    %v237 = vpack.c.bf16 %v99, %v78
    %v238 = vpack.c.bf16 %v100, %v79
    %v239 = vpack.c.bf16 %v101, %v80
    %v240 = vpack.c.bf16 %v102, %v81
    %v241 = vpack.c.bf16 %v141, %v120
    %v242 = vpack.c.bf16 %v142, %v121
    %v243 = vpack.c.bf16 %v143, %v122
    %v244 = vpack.c.bf16 %v144, %v123
    %v245 = vpack.c.bf16 %v170, %v149
    %v246 = vpack.c.bf16 %v171, %v150
    %v247 = vpack.c.bf16 %v172, %v151
    %v248 = vpack.c.bf16 %v173, %v152
    %v249 = vpack.c.bf16 %v212, %v191
    %v250 = vpack.c.bf16 %v213, %v192
    %v251 = vpack.c.bf16 %v214, %v193
    %v252 = vpack.c.bf16 %v215, %v194
    %v253 = vpack.c.bf16 %v233, %v233
    %v254 = vpack.c.bf16 %v234, %v234
    %v255 = vpack.c.bf16 %v235, %v235
    %v256 = vpack.c.bf16 %v236, %v236
    %v257 = vld [vmem:[%s3] sm:$0xf]
    %v258 = vld [vmem:[%s4] sm:$0xff]
    %260 = vset.pattern.permute.xlu0 0
    %261 = vperm.xlu0 %260, %v258
    %v262 = vpop.permute.xlu0 %261
    %vm264 = vcmask 588800
    %v266 = vsel %vm264, %v257, 0
    %vm268 = vcmask 1043456
    %v270 = vsel %vm268, %v253, 0
    %v273 = vsel %vm268, %v254, 0
    %v276 = vsel %vm268, %v255, 0
    %v279 = vsel %vm268, %v256, 0
    %281 = vmatpush.bf16.msra.mxu0 0
    %282 = vmatpush.bf16.msra.mxu0 0
    %283 = vmatpush.bf16.msra.mxu0 0
    %284 = vmatpush.bf16.msra.mxu0 %v270
    %285 = vmatpush.bf16.msra.mxu0 %v249
    %286 = vmatpush.bf16.msra.mxu0 %v245
    %287 = vmatpush.bf16.msra.mxu0 %v241
    %288 = vmatpush.bf16.msra.mxu0 %v237
    %289 = vmatmul.bf16.gmra.mxu0 %v266
    %v290 = vpop.f32.mrf.mxu0
    %v291 = vadd.f32 %v262, %v290
    %v292 = vpop.f32.mrf.mxu0
    %293 = vdwg.mxu0
    %294 = vmatpush.bf16.msra.mxu0 0
    %295 = vmatpush.bf16.msra.mxu0 0
    %296 = vmatpush.bf16.msra.mxu0 0
    %297 = vmatpush.bf16.msra.mxu0 %v273
    %298 = vmatpush.bf16.msra.mxu0 %v250
    %299 = vmatpush.bf16.msra.mxu0 %v246
    %300 = vmatpush.bf16.msra.mxu0 %v242
    %301 = vmatpush.bf16.msra.mxu0 %v238
    %302 = vmatmul.bf16.gmra.mxu0 %v266
    %v303 = vpop.f32.mrf.mxu0
    %v304 = vadd.f32 %v262, %v303
    %v305 = vpop.f32.mrf.mxu0
    %306 = vdwg.mxu0
    %307 = vmatpush.bf16.msra.mxu0 0
    %308 = vmatpush.bf16.msra.mxu0 0
    %309 = vmatpush.bf16.msra.mxu0 0
    %310 = vmatpush.bf16.msra.mxu0 %v276
    %311 = vmatpush.bf16.msra.mxu0 %v251
    %312 = vmatpush.bf16.msra.mxu0 %v247
    %313 = vmatpush.bf16.msra.mxu0 %v243
    %314 = vmatpush.bf16.msra.mxu0 %v239
    %315 = vmatmul.bf16.gmra.mxu0 %v266
    %v316 = vpop.f32.mrf.mxu0
    %v317 = vadd.f32 %v262, %v316
    %v318 = vpop.f32.mrf.mxu0
    %319 = vdwg.mxu0
    %320 = vmatpush.bf16.msra.mxu0 0
    %321 = vmatpush.bf16.msra.mxu0 0
    %322 = vmatpush.bf16.msra.mxu0 0
    %323 = vmatpush.bf16.msra.mxu0 %v279
    %324 = vmatpush.bf16.msra.mxu0 %v252
    %325 = vmatpush.bf16.msra.mxu0 %v248
    %326 = vmatpush.bf16.msra.mxu0 %v244
    %327 = vmatpush.bf16.msra.mxu0 %v240
    %328 = vmatmul.bf16.gmra.mxu0 %v266
    %v329 = vpop.f32.mrf.mxu0
    %v330 = vadd.f32 %v262, %v329
    %v331 = vpop.f32.mrf.mxu0
    %332 = vdwg.mxu0
    %v333 = vmax.f32 %v291, 0.0
    %v334 = vmax.f32 %v304, 0.0
    %v335 = vmax.f32 %v317, 0.0
    %v336 = vmax.f32 %v330, 0.0
    %337 = vrot.lane.b32.xlu0 %v333, 17
    %v338 = vpop.permute.xlu0 %337
    %339 = vrot.lane.b32.xlu0 %v334, 17
    %v340 = vpop.permute.xlu0 %339
    %341 = vrot.lane.b32.xlu0 %v335, 17
    %v342 = vpop.permute.xlu0 %341
    %343 = vrot.lane.b32.xlu0 %v336, 17
    %v344 = vpop.permute.xlu0 %343
    %v345 = vsel %vm69, %v342, %v344
    %v346 = vsel %vm69, %v340, %v342
    %v347 = vsel %vm69, %v338, %v340
    %v348 = vsel %vm69, %v344, %v338
    %v349 = vmul.f32 %v348, %v74
    %v350 = vmul.f32 %v347, %v75
    %v351 = vmul.f32 %v346, %v76
    %v352 = vmul.f32 %v345, %v77
    %353 = vrot.lane.b32.xlu0 %v333, 16
    %v354 = vpop.permute.xlu0 %353
    %355 = vrot.lane.b32.xlu0 %v334, 16
    %v356 = vpop.permute.xlu0 %355
    %357 = vrot.lane.b32.xlu0 %v335, 16
    %v358 = vpop.permute.xlu0 %357
    %359 = vrot.lane.b32.xlu0 %v336, 16
    %v360 = vpop.permute.xlu0 %359
    %v361 = vsel %vm90, %v358, %v360
    %v362 = vsel %vm90, %v356, %v358
    %v363 = vsel %vm90, %v354, %v356
    %v364 = vsel %vm90, %v360, %v354
    %v365 = vmul.f32 %v364, %v95
    %v366 = vmul.f32 %v363, %v96
    %v367 = vmul.f32 %v362, %v97
    %v368 = vmul.f32 %v361, %v98
    %369 = vrot.lane.b32.xlu0 %v333, 15
    %v370 = vpop.permute.xlu0 %369
    %371 = vrot.lane.b32.xlu0 %v334, 15
    %v372 = vpop.permute.xlu0 %371
    %373 = vrot.lane.b32.xlu0 %v335, 15
    %v374 = vpop.permute.xlu0 %373
    %375 = vrot.lane.b32.xlu0 %v336, 15
    %v376 = vpop.permute.xlu0 %375
    %v377 = vsel %vm111, %v374, %v376
    %v378 = vsel %vm111, %v372, %v374
    %v379 = vsel %vm111, %v370, %v372
    %v380 = vsel %vm111, %v376, %v370
    %v381 = vmul.f32 %v380, %v116
    %v382 = vmul.f32 %v379, %v117
    %v383 = vmul.f32 %v378, %v118
    %v384 = vmul.f32 %v377, %v119
    %385 = vrot.lane.b32.xlu0 %v333, 1
    %v386 = vpop.permute.xlu0 %385
    %387 = vrot.lane.b32.xlu0 %v334, 1
    %v388 = vpop.permute.xlu0 %387
    %389 = vrot.lane.b32.xlu0 %v335, 1
    %v390 = vpop.permute.xlu0 %389
    %391 = vrot.lane.b32.xlu0 %v336, 1
    %v392 = vpop.permute.xlu0 %391
    %v393 = vsel %vm132, %v390, %v392
    %v394 = vsel %vm132, %v388, %v390
    %v395 = vsel %vm132, %v386, %v388
    %v396 = vsel %vm132, %v392, %v386
    %v397 = vmul.f32 %v396, %v137
    %v398 = vmul.f32 %v395, %v138
    %v399 = vmul.f32 %v394, %v139
    %v400 = vmul.f32 %v393, %v140
    %v401 = vmul.f32 %v333, %v145
    %v402 = vmul.f32 %v334, %v146
    %v403 = vmul.f32 %v335, %v147
    %v404 = vmul.f32 %v336, %v148
    %405 = vrot.lane.b32.xlu0 %v333, 127
    %v406 = vpop.permute.xlu0 %405
    %407 = vrot.lane.b32.xlu0 %v334, 127
    %v408 = vpop.permute.xlu0 %407
    %409 = vrot.lane.b32.xlu0 %v335, 127
    %v410 = vpop.permute.xlu0 %409
    %411 = vrot.lane.b32.xlu0 %v336, 127
    %v412 = vpop.permute.xlu0 %411
    %v413 = vsel %vm161, %v410, %v412
    %v414 = vsel %vm161, %v408, %v410
    %v415 = vsel %vm161, %v406, %v408
    %v416 = vsel %vm161, %v412, %v406
    %v417 = vmul.f32 %v415, %v166
    %v418 = vmul.f32 %v414, %v167
    %v419 = vmul.f32 %v413, %v168
    %v420 = vmul.f32 %v416, %v169
    %421 = vrot.lane.b32.xlu0 %v333, 113
    %v422 = vpop.permute.xlu0 %421
    %423 = vrot.lane.b32.xlu0 %v334, 113
    %v424 = vpop.permute.xlu0 %423
    %425 = vrot.lane.b32.xlu0 %v335, 113
    %v426 = vpop.permute.xlu0 %425
    %427 = vrot.lane.b32.xlu0 %v336, 113
    %v428 = vpop.permute.xlu0 %427
    %v429 = vsel %vm182, %v426, %v428
    %v430 = vsel %vm182, %v424, %v426
    %v431 = vsel %vm182, %v422, %v424
    %v432 = vsel %vm182, %v428, %v422
    %v433 = vmul.f32 %v431, %v187
    %v434 = vmul.f32 %v430, %v188
    %v435 = vmul.f32 %v429, %v189
    %v436 = vmul.f32 %v432, %v190
    %437 = vrot.lane.b32.xlu0 %v333, 112
    %v438 = vpop.permute.xlu0 %437
    %439 = vrot.lane.b32.xlu0 %v334, 112
    %v440 = vpop.permute.xlu0 %439
    %441 = vrot.lane.b32.xlu0 %v335, 112
    %v442 = vpop.permute.xlu0 %441
    %443 = vrot.lane.b32.xlu0 %v336, 112
    %v444 = vpop.permute.xlu0 %443
    %v445 = vsel %vm203, %v442, %v444
    %v446 = vsel %vm203, %v440, %v442
    %v447 = vsel %vm203, %v438, %v440
    %v448 = vsel %vm203, %v444, %v438
    %v449 = vmul.f32 %v447, %v208
    %v450 = vmul.f32 %v446, %v209
    %v451 = vmul.f32 %v445, %v210
    %v452 = vmul.f32 %v448, %v211
    %453 = vrot.lane.b32.xlu0 %v333, 111
    %v454 = vpop.permute.xlu0 %453
    %455 = vrot.lane.b32.xlu0 %v334, 111
    %v456 = vpop.permute.xlu0 %455
    %457 = vrot.lane.b32.xlu0 %v335, 111
    %v458 = vpop.permute.xlu0 %457
    %459 = vrot.lane.b32.xlu0 %v336, 111
    %v460 = vpop.permute.xlu0 %459
    %v461 = vsel %vm224, %v458, %v460
    %v462 = vsel %vm224, %v456, %v458
    %v463 = vsel %vm224, %v454, %v456
    %v464 = vsel %vm224, %v460, %v454
    %v465 = vmul.f32 %v463, %v229
    %v466 = vmul.f32 %v462, %v230
    %v467 = vmul.f32 %v461, %v231
    %v468 = vmul.f32 %v464, %v232
    %v469 = vpack.c.bf16 %v365, %v349
    %v470 = vpack.c.bf16 %v366, %v350
    %v471 = vpack.c.bf16 %v367, %v351
    %v472 = vpack.c.bf16 %v368, %v352
    %v473 = vpack.c.bf16 %v397, %v381
    %v474 = vpack.c.bf16 %v398, %v382
    %v475 = vpack.c.bf16 %v399, %v383
    %v476 = vpack.c.bf16 %v400, %v384
    %v477 = vpack.c.bf16 %v417, %v401
    %v478 = vpack.c.bf16 %v418, %v402
    %v479 = vpack.c.bf16 %v419, %v403
    %v480 = vpack.c.bf16 %v420, %v404
    %v481 = vpack.c.bf16 %v449, %v433
    %v482 = vpack.c.bf16 %v450, %v434
    %v483 = vpack.c.bf16 %v451, %v435
    %v484 = vpack.c.bf16 %v452, %v436
    %v485 = vpack.c.bf16 %v465, %v465
    %v486 = vpack.c.bf16 %v466, %v466
    %v487 = vpack.c.bf16 %v467, %v467
    %v488 = vpack.c.bf16 %v468, %v468
    %v489 = vld [vmem:[%s5] sm:$0xf]
    %v490 = vld [vmem:[%s6] sm:$0xff]
    %492 = vset.pattern.permute.xlu0 0
    %493 = vperm.xlu0 %492, %v490
    %v494 = vpop.permute.xlu0 %493
    %v497 = vsel %vm264, %v489, 0
    %v500 = vsel %vm268, %v485, 0
    %v503 = vsel %vm268, %v486, 0
    %v506 = vsel %vm268, %v487, 0
    %v509 = vsel %vm268, %v488, 0
    %511 = vmatpush.bf16.msra.mxu0 0
    %512 = vmatpush.bf16.msra.mxu0 0
    %513 = vmatpush.bf16.msra.mxu0 0
    %514 = vmatpush.bf16.msra.mxu0 %v500
    %515 = vmatpush.bf16.msra.mxu0 %v481
    %516 = vmatpush.bf16.msra.mxu0 %v477
    %517 = vmatpush.bf16.msra.mxu0 %v473
    %518 = vmatpush.bf16.msra.mxu0 %v469
    %519 = vmatmul.bf16.gmra.mxu0 %v497
    %v520 = vpop.f32.mrf.mxu0
    %v521 = vadd.f32 %v494, %v520
    %v522 = vpop.f32.mrf.mxu0
    %523 = vdwg.mxu0
    %524 = vmatpush.bf16.msra.mxu0 0
    %525 = vmatpush.bf16.msra.mxu0 0
    %526 = vmatpush.bf16.msra.mxu0 0
    %527 = vmatpush.bf16.msra.mxu0 %v503
    %528 = vmatpush.bf16.msra.mxu0 %v482
    %529 = vmatpush.bf16.msra.mxu0 %v478
    %530 = vmatpush.bf16.msra.mxu0 %v474
    %531 = vmatpush.bf16.msra.mxu0 %v470
    %532 = vmatmul.bf16.gmra.mxu0 %v497
    %v533 = vpop.f32.mrf.mxu0
    %v534 = vadd.f32 %v494, %v533
    %v535 = vpop.f32.mrf.mxu0
    %536 = vdwg.mxu0
    %537 = vmatpush.bf16.msra.mxu0 0
    %538 = vmatpush.bf16.msra.mxu0 0
    %539 = vmatpush.bf16.msra.mxu0 0
    %540 = vmatpush.bf16.msra.mxu0 %v506
    %541 = vmatpush.bf16.msra.mxu0 %v483
    %542 = vmatpush.bf16.msra.mxu0 %v479
    %543 = vmatpush.bf16.msra.mxu0 %v475
    %544 = vmatpush.bf16.msra.mxu0 %v471
    %545 = vmatmul.bf16.gmra.mxu0 %v497
    %v546 = vpop.f32.mrf.mxu0
    %v547 = vadd.f32 %v494, %v546
    %v548 = vpop.f32.mrf.mxu0
    %549 = vdwg.mxu0
    %550 = vmatpush.bf16.msra.mxu0 0
    %551 = vmatpush.bf16.msra.mxu0 0
    %552 = vmatpush.bf16.msra.mxu0 0
    %553 = vmatpush.bf16.msra.mxu0 %v509
    %554 = vmatpush.bf16.msra.mxu0 %v484
    %555 = vmatpush.bf16.msra.mxu0 %v480
    %556 = vmatpush.bf16.msra.mxu0 %v476
    %557 = vmatpush.bf16.msra.mxu0 %v472
    %558 = vmatmul.bf16.gmra.mxu0 %v497
    %v559 = vpop.f32.mrf.mxu0
    %v560 = vadd.f32 %v494, %v559
    %v561 = vpop.f32.mrf.mxu0
    %562 = vdwg.mxu0
    %v563 = vmax.f32 %v521, 0.0
    %v564 = vmax.f32 %v534, 0.0
    %v565 = vmax.f32 %v547, 0.0
    %v566 = vmax.f32 %v560, 0.0
    %v567 = vld [vmem:[%s7] sm:$0xf]
    %v568 = vld [vmem:[%s7 + $0x4] sm:$0xf]
    %v569 = vpack.c.bf16 %v563, %v563
    %v570 = vpack.c.bf16 %v564, %v564
    %v571 = vpack.c.bf16 %v565, %v565
    %v572 = vpack.c.bf16 %v566, %v566
    %v573 = vld [vmem:[%s8] sm:$0xff]
    %v574 = vld [vmem:[%s8 + $0x8] sm:$0xff]
    %576 = vset.pattern.permute.xlu0 0
    %577 = vperm.xlu0 %576, %v573
    %v578 = vpop.permute.xlu0 %577
    %581 = vset.pattern.permute.xlu0 0
    %582 = vperm.xlu0 %581, %v574
    %v583 = vpop.permute.xlu0 %582
    %v587 = vunpack.c.l.b16 %v567
    %v588 = vunpack.c.l.b16 %v568
    %v589 = vpack.c.b16 %v588, %v587
    %vm590 = vcmask 64512
    %v592 = vsel %vm590, %v589, 0
    %v595 = vsel %vm268, %v569, 0
    %v598 = vsel %vm268, %v570, 0
    %v601 = vsel %vm268, %v571, 0
    %v604 = vsel %vm268, %v572, 0
    %606 = vmatpush.bf16.msra.mxu0 0
    %607 = vmatpush.bf16.msra.mxu0 0
    %608 = vmatpush.bf16.msra.mxu0 0
    %609 = vmatpush.bf16.msra.mxu0 0
    %610 = vmatpush.bf16.msra.mxu0 0
    %611 = vmatpush.bf16.msra.mxu0 0
    %612 = vmatpush.bf16.msra.mxu0 0
    %613 = vmatpush.bf16.msra.mxu0 %v595
    %614 = vmatmul.bf16.gmra.mxu0 %v592
    %v615 = vpop.f32.mrf.mxu0
    %v616 = vadd.f32 %v578, %v615
    %v617 = vpop.f32.mrf.mxu0
    %v618 = vadd.f32 %v583, %v617
    %619 = vdwg.mxu0
    %620 = vmatpush.bf16.msra.mxu0 0
    %621 = vmatpush.bf16.msra.mxu0 0
    %622 = vmatpush.bf16.msra.mxu0 0
    %623 = vmatpush.bf16.msra.mxu0 0
    %624 = vmatpush.bf16.msra.mxu0 0
    %625 = vmatpush.bf16.msra.mxu0 0
    %626 = vmatpush.bf16.msra.mxu0 0
    %627 = vmatpush.bf16.msra.mxu0 %v598
    %628 = vmatmul.bf16.gmra.mxu0 %v592
    %v629 = vpop.f32.mrf.mxu0
    %v630 = vadd.f32 %v578, %v629
    %v631 = vpop.f32.mrf.mxu0
    %v632 = vadd.f32 %v583, %v631
    %633 = vdwg.mxu0
    %634 = vmatpush.bf16.msra.mxu0 0
    %635 = vmatpush.bf16.msra.mxu0 0
    %636 = vmatpush.bf16.msra.mxu0 0
    %637 = vmatpush.bf16.msra.mxu0 0
    %638 = vmatpush.bf16.msra.mxu0 0
    %639 = vmatpush.bf16.msra.mxu0 0
    %640 = vmatpush.bf16.msra.mxu0 0
    %641 = vmatpush.bf16.msra.mxu0 %v601
    %642 = vmatmul.bf16.gmra.mxu0 %v592
    %v643 = vpop.f32.mrf.mxu0
    %v644 = vadd.f32 %v578, %v643
    %v645 = vpop.f32.mrf.mxu0
    %v646 = vadd.f32 %v583, %v645
    %647 = vdwg.mxu0
    %648 = vmatpush.bf16.msra.mxu0 0
    %649 = vmatpush.bf16.msra.mxu0 0
    %650 = vmatpush.bf16.msra.mxu0 0
    %651 = vmatpush.bf16.msra.mxu0 0
    %652 = vmatpush.bf16.msra.mxu0 0
    %653 = vmatpush.bf16.msra.mxu0 0
    %654 = vmatpush.bf16.msra.mxu0 0
    %655 = vmatpush.bf16.msra.mxu0 %v604
    %656 = vmatmul.bf16.gmra.mxu0 %v592
    %v657 = vpop.f32.mrf.mxu0
    %v658 = vadd.f32 %v578, %v657
    %v659 = vpop.f32.mrf.mxu0
    %v660 = vadd.f32 %v583, %v659
    %661 = vdwg.mxu0
    %v662 = vld [vmem:[%s9] sm:$0x77]
    %v663 = vld [vmem:[%s9 + $0x8] sm:$0x77]
    %s664 = scalar_lea.vmem %s9, 16
    %v665 = vld [vmem:[%s664] sm:$0x77]
    %v666 = vld [vmem:[%s664 + $0x8] sm:$0x77]
    %s667 = scalar_lea.vmem %s9, 32
    %v668 = vld [vmem:[%s667] sm:$0x77]
    %v669 = vld [vmem:[%s667 + $0x8] sm:$0x77]
    %s670 = scalar_lea.vmem %s9, 48
    %v671 = vld [vmem:[%s670] sm:$0x77]
    %v672 = vld [vmem:[%s670 + $0x8] sm:$0x77]
    %v673 = vmin.f32 %v618, 4.1351666
    %v674 = vmin.f32 %v632, 4.1351666
    %v675 = vmin.f32 %v646, 4.1351666
    %v676 = vmin.f32 %v660, 4.1351666
    %679 = vst [vmem:[#allocation1] ss:$2 sm:$0xff] %v668
    %s680 = scalar_lea.vmem [#allocation1], 16
    %681 = vst [vmem:[%s680] ss:$2 sm:$0xff] %v669
    %v682 = vld.sshfl [vmem:[#allocation1] sm:$0xff pattern:$0x75316420]
    %v683 = vld.sshfl [vmem:[#allocation1 + $0x8] sm:$0xff pattern:$0x75316420]
    %v684 = vld.sshfl [vmem:[#allocation1 + $0x10] sm:$0xff pattern:$0x75316420]
    %v685 = vld.sshfl [vmem:[#allocation1 + $0x18] sm:$0xff pattern:$0x75316420]
    %v686 = vrot.slane %v682, 5
    %v687 = vrot.slane %v683, 5
    %v688 = vrot.slane %v684, 5
    %v689 = vrot.slane %v685, 5
    %v694 = vmul.f32 %v616, %v686
    %v695 = vmul.f32 %v630, %v687
    %v696 = vmul.f32 %v644, %v688
    %v697 = vmul.f32 %v658, %v689
    %700 = vst [vmem:[#allocation1] ss:$2 sm:$0xff] %v662
    %s701 = scalar_lea.vmem [#allocation1], 16
    %702 = vst [vmem:[%s701] ss:$2 sm:$0xff] %v663
    %v703 = vld.sshfl [vmem:[#allocation1] sm:$0xff pattern:$0x75316420]
    %v704 = vld.sshfl [vmem:[#allocation1 + $0x8] sm:$0xff pattern:$0x75316420]
    %v705 = vld.sshfl [vmem:[#allocation1 + $0x10] sm:$0xff pattern:$0x75316420]
    %v706 = vld.sshfl [vmem:[#allocation1 + $0x18] sm:$0xff pattern:$0x75316420]
    %v707 = vrot.slane %v703, 5
    %v708 = vrot.slane %v704, 5
    %v709 = vrot.slane %v705, 5
    %v710 = vrot.slane %v706, 5
    %v715 = vadd.f32 %v694, %v707
    %v716 = vadd.f32 %v695, %v708
    %v717 = vadd.f32 %v696, %v709
    %v718 = vadd.f32 %v697, %v710
    %721 = vst [vmem:[#allocation1] ss:$2 sm:$0xff] %v671
    %s722 = scalar_lea.vmem [#allocation1], 16
    %723 = vst [vmem:[%s722] ss:$2 sm:$0xff] %v672
    %v724 = vld.sshfl [vmem:[#allocation1] sm:$0xff pattern:$0x75316420]
    %v725 = vld.sshfl [vmem:[#allocation1 + $0x8] sm:$0xff pattern:$0x75316420]
    %v726 = vld.sshfl [vmem:[#allocation1 + $0x10] sm:$0xff pattern:$0x75316420]
    %v727 = vld.sshfl [vmem:[#allocation1 + $0x18] sm:$0xff pattern:$0x75316420]
    %v728 = vrot.slane %v724, 2
    %v729 = vrot.slane %v725, 2
    %v730 = vrot.slane %v726, 2
    %v731 = vrot.slane %v727, 2
    %v736 = vmul.f32 %v616, %v728
    %v737 = vmul.f32 %v630, %v729
    %v738 = vmul.f32 %v644, %v730
    %v739 = vmul.f32 %v658, %v731
    %v740 = vmul.f32 %v618, %v728
    %v741 = vmul.f32 %v632, %v729
    %v742 = vmul.f32 %v646, %v730
    %v743 = vmul.f32 %v660, %v731
    %746 = vst [vmem:[#allocation1] ss:$2 sm:$0xff] %v665
    %s747 = scalar_lea.vmem [#allocation1], 16
    %748 = vst [vmem:[%s747] ss:$2 sm:$0xff] %v666
    %v749 = vld.sshfl [vmem:[#allocation1] sm:$0xff pattern:$0x75316420]
    %v750 = vld.sshfl [vmem:[#allocation1 + $0x8] sm:$0xff pattern:$0x75316420]
    %v751 = vld.sshfl [vmem:[#allocation1 + $0x10] sm:$0xff pattern:$0x75316420]
    %v752 = vld.sshfl [vmem:[#allocation1 + $0x18] sm:$0xff pattern:$0x75316420]
    %v753 = vrot.slane %v749, 2
    %v754 = vrot.slane %v750, 2
    %v755 = vrot.slane %v751, 2
    %v756 = vrot.slane %v752, 2
    %v761 = vadd.f32 %v736, %v753
    %v762 = vadd.f32 %v737, %v754
    %v763 = vadd.f32 %v738, %v755
    %v764 = vadd.f32 %v739, %v756
    %v765 = vadd.f32 %v740, %v753
    %v766 = vadd.f32 %v741, %v754
    %v767 = vadd.f32 %v742, %v755
    %v768 = vadd.f32 %v743, %v756
    %v769 = vmul.f32 %v673, 1.442695
    %v770 = vpow.pop %v769
    %v771 = vmul.f32 %v674, 1.442695
    %v772 = vpow.pop %v771
    %v773 = vmul.f32 %v675, 1.442695
    %v774 = vpow.pop %v773
    %v775 = vmul.f32 %v676, 1.442695
    %v776 = vpow.pop %v775
    %777 = vst [vmem:[#allocation1] ss:$2 sm:$0xff] %v668
    %s778 = scalar_lea.vmem [#allocation1], 16
    %779 = vst [vmem:[%s778] ss:$2 sm:$0xff] %v669
    %v780 = vld.sshfl [vmem:[#allocation1] sm:$0xff pattern:$0x75316420]
    %v781 = vld.sshfl [vmem:[#allocation1 + $0x8] sm:$0xff pattern:$0x75316420]
    %v782 = vld.sshfl [vmem:[#allocation1 + $0x10] sm:$0xff pattern:$0x75316420]
    %v783 = vld.sshfl [vmem:[#allocation1 + $0x18] sm:$0xff pattern:$0x75316420]
    %v784 = vrot.slane %v780, 7
    %v785 = vrot.slane %v781, 7
    %v786 = vrot.slane %v782, 7
    %v787 = vrot.slane %v783, 7
    %v792 = vmul.f32 %v770, %v784
    %v793 = vmul.f32 %v772, %v785
    %v794 = vmul.f32 %v774, %v786
    %v795 = vmul.f32 %v776, %v787
    %s796 = scalar_lea.vmem [#allocation1], 1
    %797 = vst [vmem:[%s796] ss:$2 sm:$0xff] %v671
    %s798 = scalar_lea.vmem [#allocation1], 17
    %799 = vst [vmem:[%s798] ss:$2 sm:$0xff] %v672
    %v800 = vld.sshfl [vmem:[#allocation1] sm:$0xff pattern:$0x75316420]
    %v801 = vld.sshfl [vmem:[#allocation1 + $0x8] sm:$0xff pattern:$0x75316420]
    %v802 = vld.sshfl [vmem:[#allocation1 + $0x10] sm:$0xff pattern:$0x75316420]
    %v803 = vld.sshfl [vmem:[#allocation1 + $0x18] sm:$0xff pattern:$0x75316420]
    %v808 = vmul.f32 %v770, %v800
    %v809 = vmul.f32 %v772, %v801
    %v810 = vmul.f32 %v774, %v802
    %v811 = vmul.f32 %v776, %v803
    %v812 = vmul.f32 %v792, 0.5
    %v813 = vmul.f32 %v793, 0.5
    %v814 = vmul.f32 %v794, 0.5
    %v815 = vmul.f32 %v795, 0.5
    %v820 = vrot.slane %v812, 6
    %v821 = vrot.slane %v813, 6
    %v822 = vrot.slane %v814, 6
    %v823 = vrot.slane %v815, 6
    %v828 = vsub.f32 %v715, %v820
    %v829 = vsub.f32 %v716, %v821
    %v830 = vsub.f32 %v717, %v822
    %v831 = vsub.f32 %v718, %v823
    %v832 = vmul.f32 %v808, 0.5
    %v833 = vmul.f32 %v809, 0.5
    %v834 = vmul.f32 %v810, 0.5
    %v835 = vmul.f32 %v811, 0.5
    %v840 = vrot.slane %v832, 6
    %v841 = vrot.slane %v833, 6
    %v842 = vrot.slane %v834, 6
    %v843 = vrot.slane %v835, 6
    %v848 = vsub.f32 %v761, %v840
    %v849 = vsub.f32 %v762, %v841
    %v850 = vsub.f32 %v763, %v842
    %v851 = vsub.f32 %v764, %v843
    %v852 = vsub.f32 %v765, %v840
    %v853 = vsub.f32 %v766, %v841
    %v854 = vsub.f32 %v767, %v842
    %v855 = vsub.f32 %v768, %v843
    %v856 = vadd.f32 %v715, %v820
    %v857 = vadd.f32 %v716, %v821
    %v858 = vadd.f32 %v717, %v822
    %v859 = vadd.f32 %v718, %v823
    %v860 = vadd.f32 %v761, %v840
    %v861 = vadd.f32 %v762, %v841
    %v862 = vadd.f32 %v763, %v842
    %v863 = vadd.f32 %v764, %v843
    %v864 = vadd.f32 %v765, %v840
    %v865 = vadd.f32 %v766, %v841
    %v866 = vadd.f32 %v767, %v842
    %v867 = vadd.f32 %v768, %v843
    %v868 = vmax.f32 %v828, 0.0
    %v869 = vmax.f32 %v829, 0.0
    %v870 = vmax.f32 %v830, 0.0
    %v871 = vmax.f32 %v831, 0.0
    %v872 = vmin.f32 %v868, 16.0
    %v873 = vmin.f32 %v869, 16.0
    %v874 = vmin.f32 %v870, 16.0
    %v875 = vmin.f32 %v871, 16.0
    %v876 = vmul.f32 %v872, 2.0
    %v877 = vmul.f32 %v873, 2.0
    %v878 = vmul.f32 %v874, 2.0
    %v879 = vmul.f32 %v875, 2.0
    %v880 = vmax.f32 %v876, 0.0
    %v881 = vmax.f32 %v877, 0.0
    %v882 = vmax.f32 %v878, 0.0
    %v883 = vmax.f32 %v879, 0.0
    %v884 = vmin.f32 %v880, 32.0
    %v885 = vmin.f32 %v881, 32.0
    %v886 = vmin.f32 %v882, 32.0
    %v887 = vmin.f32 %v883, 32.0
    %v888 = vmax.f32 %v856, 0.0
    %v889 = vmax.f32 %v857, 0.0
    %v890 = vmax.f32 %v858, 0.0
    %v891 = vmax.f32 %v859, 0.0
    %v892 = vmin.f32 %v888, 16.0
    %v893 = vmin.f32 %v889, 16.0
    %v894 = vmin.f32 %v890, 16.0
    %v895 = vmin.f32 %v891, 16.0
    %v896 = vmul.f32 %v892, 2.0
    %v897 = vmul.f32 %v893, 2.0
    %v898 = vmul.f32 %v894, 2.0
    %v899 = vmul.f32 %v895, 2.0
    %v900 = vmax.f32 %v896, 0.0
    %v901 = vmax.f32 %v897, 0.0
    %v902 = vmax.f32 %v898, 0.0
    %v903 = vmax.f32 %v899, 0.0
    %v904 = vmin.f32 %v900, 32.0
    %v905 = vmin.f32 %v901, 32.0
    %v906 = vmin.f32 %v902, 32.0
    %v907 = vmin.f32 %v903, 32.0
    %v908 = vmax.f32 %v848, 0.0
    %v909 = vmax.f32 %v849, 0.0
    %v910 = vmax.f32 %v850, 0.0
    %v911 = vmax.f32 %v851, 0.0
    %v912 = vmax.f32 %v852, 0.0
    %v913 = vmax.f32 %v853, 0.0
    %v914 = vmax.f32 %v854, 0.0
    %v915 = vmax.f32 %v855, 0.0
    %v916 = vmin.f32 %v908, 16.0
    %v917 = vmin.f32 %v909, 16.0
    %v918 = vmin.f32 %v910, 16.0
    %v919 = vmin.f32 %v911, 16.0
    %v920 = vmin.f32 %v912, 16.0
    %v921 = vmin.f32 %v913, 16.0
    %v922 = vmin.f32 %v914, 16.0
    %v923 = vmin.f32 %v915, 16.0
    %v924 = vmul.f32 %v916, 2.0
    %v925 = vmul.f32 %v917, 2.0
    %v926 = vmul.f32 %v918, 2.0
    %v927 = vmul.f32 %v919, 2.0
    %v928 = vmul.f32 %v920, 2.0
    %v929 = vmul.f32 %v921, 2.0
    %v930 = vmul.f32 %v922, 2.0
    %v931 = vmul.f32 %v923, 2.0
    %v932 = vmax.f32 %v924, 0.0
    %v933 = vmax.f32 %v925, 0.0
    %v934 = vmax.f32 %v926, 0.0
    %v935 = vmax.f32 %v927, 0.0
    %v936 = vmax.f32 %v928, 0.0
    %v937 = vmax.f32 %v929, 0.0
    %v938 = vmax.f32 %v930, 0.0
    %v939 = vmax.f32 %v931, 0.0
    %v940 = vmin.f32 %v932, 32.0
    %v941 = vmin.f32 %v933, 32.0
    %v942 = vmin.f32 %v934, 32.0
    %v943 = vmin.f32 %v935, 32.0
    %v944 = vmin.f32 %v936, 32.0
    %v945 = vmin.f32 %v937, 32.0
    %v946 = vmin.f32 %v938, 32.0
    %v947 = vmin.f32 %v939, 32.0
    %v948 = vmax.f32 %v860, 0.0
    %v949 = vmax.f32 %v861, 0.0
    %v950 = vmax.f32 %v862, 0.0
    %v951 = vmax.f32 %v863, 0.0
    %v952 = vmax.f32 %v864, 0.0
    %v953 = vmax.f32 %v865, 0.0
    %v954 = vmax.f32 %v866, 0.0
    %v955 = vmax.f32 %v867, 0.0
    %v956 = vmin.f32 %v948, 16.0
    %v957 = vmin.f32 %v949, 16.0
    %v958 = vmin.f32 %v950, 16.0
    %v959 = vmin.f32 %v951, 16.0
    %v960 = vmin.f32 %v952, 16.0
    %v961 = vmin.f32 %v953, 16.0
    %v962 = vmin.f32 %v954, 16.0
    %v963 = vmin.f32 %v955, 16.0
    %v964 = vmul.f32 %v956, 2.0
    %v965 = vmul.f32 %v957, 2.0
    %v966 = vmul.f32 %v958, 2.0
    %v967 = vmul.f32 %v959, 2.0
    %v968 = vmul.f32 %v960, 2.0
    %v969 = vmul.f32 %v961, 2.0
    %v970 = vmul.f32 %v962, 2.0
    %v971 = vmul.f32 %v963, 2.0
    %v972 = vmax.f32 %v964, 0.0
    %v973 = vmax.f32 %v965, 0.0
    %v974 = vmax.f32 %v966, 0.0
    %v975 = vmax.f32 %v967, 0.0
    %v976 = vmax.f32 %v968, 0.0
    %v977 = vmax.f32 %v969, 0.0
    %v978 = vmax.f32 %v970, 0.0
    %v979 = vmax.f32 %v971, 0.0
    %v980 = vmin.f32 %v972, 32.0
    %v981 = vmin.f32 %v973, 32.0
    %v982 = vmin.f32 %v974, 32.0
    %v983 = vmin.f32 %v975, 32.0
    %v984 = vmin.f32 %v976, 32.0
    %v985 = vmin.f32 %v977, 32.0
    %v986 = vmin.f32 %v978, 32.0
    %v987 = vmin.f32 %v979, 32.0
    %v992 = vrot.slane %v904, 2
    %v993 = vrot.slane %v905, 2
    %v994 = vrot.slane %v906, 2
    %v995 = vrot.slane %v907, 2
    %vm1008 = vcmask 1045504
    %v1009 = vrot.slane %v980, 2
    %v1010 = vrot.slane %v984, 2
    %v1011 = vsel %vm1008, %v1009, %v1010
    %v1012 = vrot.slane %v981, 2
    %v1013 = vrot.slane %v985, 2
    %v1014 = vsel %vm1008, %v1012, %v1013
    %v1015 = vrot.slane %v982, 2
    %v1016 = vrot.slane %v986, 2
    %v1017 = vsel %vm1008, %v1015, %v1016
    %v1018 = vrot.slane %v983, 2
    %v1019 = vrot.slane %v987, 2
    %v1020 = vsel %vm1008, %v1018, %v1019
    %vm1025 = vcmask 1042432
    %v1026 = vsel %vm1025, %v616, %v884
    %v1027 = vsel %vm1025, %v630, %v885
    %v1028 = vsel %vm1025, %v644, %v886
    %v1029 = vsel %vm1025, %v658, %v887
    %v1030 = vsel %vm1008, %v1026, %v940
    %v1031 = vsel %vm1008, %v1027, %v941
    %v1032 = vsel %vm1008, %v1028, %v942
    %v1033 = vsel %vm1008, %v1029, %v943
    %vm1034 = vcmask 1040384
    %v1035 = vsel %vm1034, %v944, %v992
    %v1036 = vsel %vm1034, %v945, %v993
    %v1037 = vsel %vm1034, %v946, %v994
    %v1038 = vsel %vm1034, %v947, %v995
    %v1039 = vsel %vm268, %v1035, %v1011
    %v1040 = vsel %vm268, %v1036, %v1014
    %v1041 = vsel %vm268, %v1037, %v1017
    %v1042 = vsel %vm268, %v1038, %v1020
    %vm1043 = vcmask 1046528
    %v1044 = vsel %vm1043, %v1039, 0.0
    %v1045 = vsel %vm1043, %v1040, 0.0
    %v1046 = vsel %vm1043, %v1041, 0.0
    %v1047 = vsel %vm1043, %v1042, 0.0
    %1048 = vst [vmem:[#allocation2] sm:$0xff] %v1030
    %1049 = vst [vmem:[#allocation2 + $0x8] sm:$0xff] %v1031
    %1050 = vst [vmem:[#allocation2 + $0x10] sm:$0xff] %v1032
    %1051 = vst [vmem:[#allocation2 + $0x18] sm:$0xff] %v1033
    %1052 = vst [vmem:[#allocation2 + $0x20] sm:$0xff] %v1044
    %1053 = vst [vmem:[#allocation2 + $0x28] sm:$0xff] %v1045
    %1054 = vst [vmem:[#allocation2 + $0x30] sm:$0xff] %v1046
    %1055 = vst [vmem:[#allocation2 + $0x38] sm:$0xff] %v1047
    // Predicated region
    $region42: #{tpu_custom_call.1} parent=1 // pred_check
      _
    $region43: #{tpu_custom_call.1} parent=1 // pred_check_branch
      %1057 = sbr.rel (0) target = $region45
    $region44: #{tpu_custom_call.1} parent=1 // pred_region
      %1059 = vsyncadd [#allocation3], 0
      %s1060 = sshll.u32 [#allocation2], 4
      %s1061 = int_to_ptr.vmem [resolvable:$true] %s1060
      %s1062 = sshll.u32 %s10, 4
      %s1063 = int_to_ptr.hbm [resolvable:$true] %s1062
      %1068 = dma.vmem_to_hbm [thread:$0]  %s1061, 1024, %s1063, [#allocation3], 512, 512, 32
    $region45: #{tpu_custom_call.1} parent=1 // pred_fallthru
      _
    // Predicated region
    $region46: #{tpu_custom_call.1} parent=1 // pred_check
      _
    $region47: #{tpu_custom_call.1} parent=1 // pred_check_branch
      %1070 = sbr.rel (0) target = $region49
    $region48: #{tpu_custom_call.1} parent=1 // pred_region
      %1072 = dma.done [#allocation3], 1024
    $region49: #{tpu_custom_call.1} parent=1 // pred_fallthru
      _
    %1073 = vsyncpa [#allocation3], 1

</llo_original>
